<compile_context>
chip_gen: v6e
topology: v6e:2x2x1
jax: 0.10.0
libtpu: 0.0.40
codegen_flags: <defaults>
</compile_context>

<pallas_src>
import jax
import jax.numpy as jnp
from jax.experimental import pallas as pl
from jax.experimental.pallas import tpu as pltpu


def attn_agg_kernel(neigh_ref, mask_ref, srb_ref, wet_ref, v_ref, out_ref):
    # neigh_ref: (Bb, T, M, H)  bf16    mask_ref: (Bb, T, M)  f32
    # srb_ref:   (Bb, H)        f32     (hoisted  s@Ws^T + r@Wr^T + b)
    # wet_ref:   (H, H)         bf16    (We^T, acts on the neighbor chunk)
    # v_ref:     (1, H)         f32
    # out_ref:   (Bb, T, H)     f32     (attention-weighted neighbor aggregate)
    Bb, T, M, H = neigh_ref.shape
    neigh = neigh_ref[...]                                   # (Bb,T,M,H) bf16

    # One flat 2-D MXU matmul over all Bb*T*M rows; bf16 in, f32 accumulate.
    proj = jnp.dot(neigh.reshape(Bb * T * M, H), wet_ref[...],
                   preferred_element_type=jnp.float32)       # (Bb*T*M, H)
    proj = proj.reshape(Bb, T, M, H)

    # hidden = tanh(attn_s(em_s_r)); s/r/bias contribution was hoisted.
    hid = jnp.tanh(proj + srb_ref[...][:, None, None, :])    # (Bb,T,M,H) f32

    # score_j = <hid_j, v>: VPU multiply + lane reduce (keeps the MXU free).
    score = jnp.sum(hid * v_ref[...], axis=-1)               # (Bb,T,M)

    # masked softmax over the neighbor axis of each timestep
    mask = mask_ref[...]                                     # (Bb,T,M)
    score = jnp.where(mask > 0, score, -1e30)
    mmax = jnp.max(score, axis=-1, keepdims=True)
    e = jnp.exp(score - mmax) * mask
    denom = jnp.sum(e, axis=-1, keepdims=True)
    w = e / jnp.maximum(denom, 1e-30)                        # (Bb,T,M)

    # weighted sum of neighbor embeddings: VPU multiply + sublane reduce.
    # (padded timesteps have w == 0 everywhere -> agg == 0, matching the
    #  torch.zeros init of the original sequence tensor.)
    agg = jnp.sum(w[..., None] * neigh.astype(jnp.float32), axis=2)  # (Bb,T,H)
    out_ref[...] = agg


def attn_aggregator_forward(neigh, mask, s_emb, r_emb, w_attn, b_attn, v_s,
                            *, block_b=None):
    """Padded forward of AttnAggregator. Returns [B, T, 3H] (pre-packing)."""
    B, T, M, H = neigh.shape
    if block_b is None:
        # Demo-scale working set fits VMEM many times over: one grid step.
        # For large B pick block_b (a divisor of B, ideally a multiple of 8)
        # so the double-buffered bf16 neigh block fits the scoped VMEM budget.
        block_b = B
    assert B % block_b == 0

    # Split the Linear(3H -> H) by input chunks and hoist the s/r parts:
    #   em_s_r @ W^T + b = em @ We^T + (s @ Ws^T + r @ Wr^T + b)
    we_t = w_attn[:, :H].T.astype(jnp.bfloat16)              # (H_in, H_out)
    ws = w_attn[:, H:2 * H]
    wr = w_attn[:, 2 * H:]
    srb = (s_emb @ ws.T + r_emb @ wr.T + b_attn[None, :]).astype(jnp.float32)
    v_row = v_s.reshape(1, H).astype(jnp.float32)

    neigh_bf = neigh.astype(jnp.bfloat16)
    mask_f = mask.astype(jnp.float32)

    agg = pl.pallas_call(
        attn_agg_kernel,
        out_shape=jax.ShapeDtypeStruct((B, T, H), jnp.float32),
        grid_spec=pltpu.PrefetchScalarGridSpec(
            num_scalar_prefetch=0,
            grid=(B // block_b,),
            in_specs=[
                pl.BlockSpec((block_b, T, M, H), lambda b: (b, 0, 0, 0)),
                pl.BlockSpec((block_b, T, M), lambda b: (b, 0, 0)),
                pl.BlockSpec((block_b, H), lambda b: (b, 0)),
                pl.BlockSpec((H, H), lambda b: (0, 0)),
                pl.BlockSpec((1, H), lambda b: (0, 0)),
            ],
            out_specs=pl.BlockSpec((block_b, T, H), lambda b: (b, 0, 0)),
        ),
        compiler_params=pltpu.CompilerParams(
            dimension_semantics=("parallel",),
            # Raise v5e's 16 MiB default scoped VMEM; stays within v7x's
            # 64 MiB physical VMEM.
            vmem_limit_bytes=32 * 1024 * 1024),
    )(neigh_bf, mask_f, srb, we_t, v_row)

    # Assemble the padded [B, T, 3H] sequence tensor (the pre-packing layout
    # of the original module) outside the kernel: the s/r tiles are pure
    # broadcasts, so emitting them from the kernel would only triple output
    # HBM traffic.
    valid_t = (jnp.sum(mask_f, axis=-1, keepdims=True) > 0).astype(jnp.float32)
    s_tile = jnp.broadcast_to(s_emb[:, None, :], (B, T, H))
    r_tile = jnp.broadcast_to(r_emb[:, None, :], (B, T, H))
    out = jnp.concatenate([agg, s_tile, r_tile], axis=-1) * valid_t
    return out


def reference_forward(neigh, mask, s_emb, r_emb, w_attn, b_attn, v_s):
    """Plain-JAX reference with identical padded semantics.

    neigh and the neighbor slice of w_attn are rounded to bf16 to match the
    compute precision the kernel uses for its dominant (memory-bound) stream;
    all arithmetic here is f32, mirroring the original module's math.
    """
    B, T, M, H = neigh.shape
    neigh_q = neigh.astype(jnp.bfloat16).astype(jnp.float32)
    w_q = w_attn.at[:, :H].set(
        w_attn[:, :H].astype(jnp.bfloat16).astype(jnp.float32))
    s_rep = jnp.broadcast_to(s_emb[:, None, None, :], (B, T, M, H))
    r_rep = jnp.broadcast_to(r_emb[:, None, None, :], (B, T, M, H))
    em_s_r = jnp.concatenate([neigh_q, s_rep, r_rep], axis=-1)      # (B,T,M,3H)
    hid = jnp.tanh(jnp.einsum('btmk,jk->btmj', em_s_r, w_q) + b_attn)
    score = jnp.einsum('btmj,j->btm', hid, v_s[:, 0])
    score = jnp.where(mask > 0, score, -1e30)
    e = jnp.exp(score - jnp.max(score, axis=-1, keepdims=True)) * mask
    w = e / jnp.maximum(jnp.sum(e, axis=-1, keepdims=True), 1e-30)
    agg = jnp.einsum('btm,btmh->bth', w, neigh_q)
    out = jnp.concatenate(
        [agg,
         jnp.broadcast_to(s_emb[:, None, :], (B, T, H)),
         jnp.broadcast_to(r_emb[:, None, :], (B, T, H))], axis=-1)
    valid_t = (jnp.sum(mask, axis=-1, keepdims=True) > 0).astype(out.dtype)
    return out * valid_t


if __name__ == "__main__":
    B, T, M, H = 4, 8, 16, 32      # batch, seq_len, max neighbors/step, h_dim
    key = jax.random.PRNGKey(0)
    k1, k2, k3, k4, k5, k6, k7 = jax.random.split(key, 7)

    # ---- deterministic parameters (shapes from AttnAggregator.__init__) ----
    # attn_s = nn.Linear(3*H, H): weight (H, 3H), bias (H)
    lim_w = (6.0 / (3 * H + H)) ** 0.5
    w_attn = jax.random.uniform(k1, (H, 3 * H), jnp.float32, -lim_w, lim_w)
    b_attn = jax.random.uniform(k2, (H,), jnp.float32, -0.1, 0.1)
    # v_s: (H, 1), xavier_uniform with relu gain sqrt(2)
    lim_v = (2.0 ** 0.5) * (6.0 / (H + 1)) ** 0.5
    v_s = jax.random.uniform(k3, (H, 1), jnp.float32, -lim_v, lim_v)

    # ---- deterministic padded inputs (stand-in for ragged s_hist) ----------
    neigh = jax.random.normal(k4, (B, T, M, H), jnp.float32)
    s_emb = jax.random.normal(k5, (B, H), jnp.float32)     # ent_embeds[s_tem]
    r_emb = jax.random.normal(k6, (B, H), jnp.float32)     # rel_embeds[r_tem]

    # per-subject history length and per-timestep neighbor counts
    hist_len = jnp.array([T, 5, 3, 1], dtype=jnp.int32)                 # s_len_non_zero
    n_neigh = 1 + (jax.random.randint(k7, (B, T), 0, M) % M)            # 1..M
    t_idx = jnp.arange(T)[None, :, None]
    m_idx = jnp.arange(M)[None, None, :]
    mask = ((t_idx < hist_len[:, None, None]) &
            (m_idx < n_neigh[:, :, None])).astype(jnp.float32)          # (B,T,M)
    neigh = neigh * mask[..., None]   # zero padded neighbor slots

    out = attn_aggregator_forward(neigh, mask, s_emb, r_emb, w_attn, b_attn, v_s)
    out = jax.block_until_ready(out)

    ref = reference_forward(neigh, mask, s_emb, r_emb, w_attn, b_attn, v_s)
    assert out.shape == (B, T, 3 * H)
    assert jnp.allclose(out, ref, atol=2e-3, rtol=2e-3), "mismatch vs reference"
    print("KERNEL_OK")
</pallas_src>

<mosaic_0001>
module attributes {stable_mosaic.version = 11 : i64} {
  func.func @attn_agg_kernel(%arg0: i32, %arg1: memref<4x8x16x32xbf16, #tpu.memory_space<vmem>>, %arg2: memref<4x8x16xf32, #tpu.memory_space<vmem>>, %arg3: memref<4x32xf32, #tpu.memory_space<vmem>>, %arg4: memref<32x32xbf16, #tpu.memory_space<vmem>>, %arg5: memref<1x32xf32, #tpu.memory_space<vmem>>, %arg6: memref<4x8x32xf32, #tpu.memory_space<vmem>>) attributes {dimension_semantics = [#tpu.dimension_semantics<parallel>], iteration_bounds = array<i64: 1>, scalar_prefetch = 0 : i64, scratch_operands = 0 : i64, tpu.core_type = #tpu.core_type<tc>, window_params = [{transform_indices = @transform_0, window_bounds = array<i64: 4, 8, 16, 32>}, {transform_indices = @transform_1, window_bounds = array<i64: 4, 8, 16>}, {transform_indices = @transform_2, window_bounds = array<i64: 4, 32>}, {pipeline_mode = #tpu.pipeline_mode<synchronous>, transform_indices = @transform_3, window_bounds = array<i64: 32, 32>}, {pipeline_mode = #tpu.pipeline_mode<synchronous>, transform_indices = @transform_4, window_bounds = array<i64: 1, 32>}, {transform_indices = @transform_5, window_bounds = array<i64: 4, 8, 32>}]} {
    %c0 = arith.constant 0 : index
    %c0_0 = arith.constant 0 : index
    %c0_1 = arith.constant 0 : index
    %c0_2 = arith.constant 0 : index
    %0 = vector.load %arg1[%c0, %c0_0, %c0_1, %c0_2] : memref<4x8x16x32xbf16, #tpu.memory_space<vmem>>, vector<4x8x16x32xbf16>
    %1 = vector.shape_cast %0 : vector<4x8x16x32xbf16> to vector<512x32xbf16>
    %c0_3 = arith.constant 0 : index
    %c0_4 = arith.constant 0 : index
    %2 = vector.load %arg4[%c0_3, %c0_4] : memref<32x32xbf16, #tpu.memory_space<vmem>>, vector<32x32xbf16>
    %cst = arith.constant dense<0.000000e+00> : vector<512x32xf32>
    %3 = tpu.matmul %1, %2, %cst {dimension_numbers = #tpu.dot_dimension_numbers<[1], [0], [0], [1], [0, 0, 1, 1], [], []>} : vector<512x32xbf16>, vector<32x32xbf16>, vector<512x32xf32> -> vector<512x32xf32>
    %4 = vector.shape_cast %3 : vector<512x32xf32> to vector<4x8x16x32xf32>
    %c0_5 = arith.constant 0 : index
    %c0_6 = arith.constant 0 : index
    %5 = vector.load %arg3[%c0_5, %c0_6] : memref<4x32xf32, #tpu.memory_space<vmem>>, vector<4x32xf32>
    %6 = vector.shape_cast %5 : vector<4x32xf32> to vector<4x1x1x32xf32>
    %7 = vector.broadcast %6 : vector<4x1x1x32xf32> to vector<4x8x16x32xf32>
    %8 = arith.addf %4, %7 : vector<4x8x16x32xf32>
    %9 = math.tanh %8 : vector<4x8x16x32xf32>
    %c0_7 = arith.constant 0 : index
    %c0_8 = arith.constant 0 : index
    %10 = vector.load %arg5[%c0_7, %c0_8] : memref<1x32xf32, #tpu.memory_space<vmem>>, vector<1x32xf32>
    %11 = vector.shape_cast %10 : vector<1x32xf32> to vector<1x1x1x32xf32>
    %12 = vector.broadcast %11 : vector<1x1x1x32xf32> to vector<4x8x16x32xf32>
    %13 = arith.mulf %9, %12 : vector<4x8x16x32xf32>
    %cst_9 = arith.constant dense<0.000000e+00> : vector<4x8x16xf32>
    %14 = vector.multi_reduction <add>, %13, %cst_9 [3] : vector<4x8x16x32xf32> to vector<4x8x16xf32>
    %c0_10 = arith.constant 0 : index
    %c0_11 = arith.constant 0 : index
    %c0_12 = arith.constant 0 : index
    %15 = vector.load %arg2[%c0_10, %c0_11, %c0_12] : memref<4x8x16xf32, #tpu.memory_space<vmem>>, vector<4x8x16xf32>
    %cst_13 = arith.constant 0.000000e+00 : f32
    %16 = vector.broadcast %cst_13 : f32 to vector<4x8x16xf32>
    %17 = arith.cmpf ogt, %15, %16 : vector<4x8x16xf32>
    %cst_14 = arith.constant -1.000000e+30 : f32
    %18 = vector.broadcast %cst_14 : f32 to vector<4x8x16xf32>
    %19 = arith.select %17, %14, %18 : vector<4x8x16xi1>, vector<4x8x16xf32>
    %cst_15 = arith.constant dense<0xFF800000> : vector<4x8xf32>
    %20 = vector.multi_reduction <maximumf>, %19, %cst_15 [2] : vector<4x8x16xf32> to vector<4x8xf32>
    %21 = vector.shape_cast %20 : vector<4x8xf32> to vector<4x8x1xf32>
    %22 = vector.broadcast %21 : vector<4x8x1xf32> to vector<4x8x16xf32>
    %23 = arith.subf %19, %22 : vector<4x8x16xf32>
    %24 = math.exp %23 : vector<4x8x16xf32>
    %25 = arith.mulf %24, %15 : vector<4x8x16xf32>
    %cst_16 = arith.constant dense<0.000000e+00> : vector<4x8xf32>
    %26 = vector.multi_reduction <add>, %25, %cst_16 [2] : vector<4x8x16xf32> to vector<4x8xf32>
    %27 = vector.shape_cast %26 : vector<4x8xf32> to vector<4x8x1xf32>
    %cst_17 = arith.constant 1.000000e-30 : f32
    %28 = vector.broadcast %cst_17 : f32 to vector<4x8x1xf32>
    %29 = arith.maximumf %27, %28 : vector<4x8x1xf32>
    %30 = vector.broadcast %29 : vector<4x8x1xf32> to vector<4x8x16xf32>
    %31 = arith.divf %25, %30 : vector<4x8x16xf32>
    %32 = vector.shape_cast %31 : vector<4x8x16xf32> to vector<4x8x16x1xf32>
    %33 = arith.extf %0 : vector<4x8x16x32xbf16> to vector<4x8x16x32xf32>
    %34 = vector.broadcast %32 : vector<4x8x16x1xf32> to vector<4x8x16x32xf32>
    %35 = arith.mulf %34, %33 : vector<4x8x16x32xf32>
    %cst_18 = arith.constant dense<0.000000e+00> : vector<4x8x32xf32>
    %36 = vector.multi_reduction <add>, %35, %cst_18 [2] : vector<4x8x16x32xf32> to vector<4x8x32xf32>
    %c0_19 = arith.constant 0 : index
    %c0_20 = arith.constant 0 : index
    %c0_21 = arith.constant 0 : index
    %37 = vector.load %arg6[%c0_19, %c0_20, %c0_21] : memref<4x8x32xf32, #tpu.memory_space<vmem>>, vector<4x8x32xf32>
    tpu.vector_store %arg6[%c0_19, %c0_20, %c0_21], %36 {strides = array<i32>} : memref<4x8x32xf32, #tpu.memory_space<vmem>>, vector<4x8x32xf32>,
    return
  }
  func.func @transform_0(%arg0: i32) -> (i32, i32, i32, i32) {
    %c0_i32 = arith.constant 0 : i32
    %c0_i32_0 = arith.constant 0 : i32
    %c0_i32_1 = arith.constant 0 : i32
    %c0_i32_2 = arith.constant 0 : i32
    return %arg0, %c0_i32, %c0_i32_0, %c0_i32_1 : i32, i32, i32, i32
  }
  func.func @transform_1(%arg0: i32) -> (i32, i32, i32) {
    %c0_i32 = arith.constant 0 : i32
    %c0_i32_0 = arith.constant 0 : i32
    %c0_i32_1 = arith.constant 0 : i32
    return %arg0, %c0_i32, %c0_i32_0 : i32, i32, i32
  }
  func.func @transform_2(%arg0: i32) -> (i32, i32) {
    %c0_i32 = arith.constant 0 : i32
    %c0_i32_0 = arith.constant 0 : i32
    return %arg0, %c0_i32 : i32, i32
  }
  func.func @transform_3(%arg0: i32) -> (i32, i32) {
    %c0_i32 = arith.constant 0 : i32
    %c0_i32_0 = arith.constant 0 : i32
    %c0_i32_1 = arith.constant 0 : i32
    return %c0_i32, %c0_i32_0 : i32, i32
  }
  func.func @transform_4(%arg0: i32) -> (i32, i32) {
    %c0_i32 = arith.constant 0 : i32
    %c0_i32_0 = arith.constant 0 : i32
    %c0_i32_1 = arith.constant 0 : i32
    return %c0_i32, %c0_i32_0 : i32, i32
  }
  func.func @transform_5(%arg0: i32) -> (i32, i32, i32) {
    %c0_i32 = arith.constant 0 : i32
    %c0_i32_0 = arith.constant 0 : i32
    %c0_i32_1 = arith.constant 0 : i32
    return %arg0, %c0_i32, %c0_i32_0 : i32, i32, i32
  }
}

</mosaic_0001>

<llo_original>
// kernel: tpu_custom_call.1
$region0: #{tpu_custom_call.1}
  #allocation0 [shape = 'u32[]', space=smem, size = 0x4, offset = 0x4, fixed_abs, tag = 'smem constant byte address 0x4 - core index']
  #allocation1 [shape = 'u32[144,128]{1,0:T(1,128)}', space=vmem, size = 0x12000, scoped, tag = 'internal scratch']
  %s0 = inlined_call_operand.hbm [shape: bf16[4,8,16,32], index: 0, kind: input, shape index: {}]
  %s1 = inlined_call_operand.hbm [shape: f32[4,8,16], index: 1, kind: input, shape index: {}]
  %s2 = inlined_call_operand.hbm [shape: f32[4,32], index: 2, kind: input, shape index: {}]
  %s3 = inlined_call_operand.hbm [shape: bf16[32,32], index: 3, kind: input, shape index: {}]
  %s4 = inlined_call_operand.vmem [shape: f32[1,32], index: 4, kind: input, shape index: {}]
  %s5 = inlined_call_operand.hbm [shape: f32[4,8,32], index: 5, kind: output, shape index: {}]
  %s6 = sld [smem:[#allocation0]]
  $region46: #{tpu_custom_call.1} parent=0
    _
  %s8 = ssub.s32 1, %s6
  %s9 = scalar_select 0, %s8, %s6
  $region1: #{tpu_custom_call.1} parent=0
    #allocation2 [shape = 'u8[131072]{0}', space=vmem, size = 0x20000, scoped, tag = 'input window, operand 0, single buffered']
    #allocation3 [shape = 's32[1]{0}', space=sflag, size = 0x4, scoped, tag = 'scoped memory for tpu_custom_call.1']
    #allocation4 [shape = 's32[1]{0}', space=sflag, size = 0x4, scoped, tag = 'scoped memory for tpu_custom_call.1']
    #allocation5 [shape = 'u8[16384]{0}', space=vmem, size = 0x4000, scoped, tag = 'input window, operand 1, single buffered']
    #allocation6 [shape = 's32[1]{0}', space=sflag, size = 0x4, scoped, tag = 'scoped memory for tpu_custom_call.1']
    #allocation7 [shape = 'u8[2048]{0}', space=vmem, size = 0x800, scoped, tag = 'input window, operand 2, single buffered']
    #allocation8 [shape = 'u8[8192]{0}', space=vmem, size = 0x2000, scoped, tag = 'input window, operand 3, single buffered']
    #allocation9 [shape = 's32[1]{0}', space=sflag, size = 0x4, scoped, tag = 'scoped memory for tpu_custom_call.1']
    #allocation10 [shape = 'u8[16384]{0}', space=vmem, size = 0x4000, scoped, tag = 'output window, operand 0, single buffered']
    %10 = vsyncpa [#allocation3], 0
    %11 = vsyncpa [#allocation6], 0
    %12 = vsyncpa [#allocation9], 0
    %13 = vsyncpa [#allocation4], 0
    // Predicated region
    $region2: #{tpu_custom_call.1} parent=1 // pred_check
      _
    $region3: #{tpu_custom_call.1} parent=1 // pred_check_branch
      %15 = sbr.rel (0) target = $region5
    $region4: #{tpu_custom_call.1} parent=1 // pred_region
      %s17 = ssub.s32 4096, 4096
      %18 = vsyncadd [#allocation3], %s17
      %s19 = sshll.u32 [#allocation2], 4
      %s20 = int_to_ptr.vmem [resolvable:$true] %s19
      %25 = dma.hbm_to_vmem [thread:$0]  %s0, 4096, %s20, [#allocation3], 64, 64, 4
    $region5: #{tpu_custom_call.1} parent=1 // pred_fallthru
      _
    // Predicated region
    $region6: #{tpu_custom_call.1} parent=1 // pred_check
      _
    $region7: #{tpu_custom_call.1} parent=1 // pred_check_branch
      %27 = sbr.rel (0) target = $region9
    $region8: #{tpu_custom_call.1} parent=1 // pred_region
      %s29 = ssub.s32 512, 512
      %30 = vsyncadd [#allocation6], %s29
      %s31 = sshll.u32 [#allocation5], 4
      %s32 = int_to_ptr.vmem [resolvable:$true] %s31
      %37 = dma.hbm_to_vmem [thread:$0]  %s1, 512, %s32, [#allocation6], 128, 128, 8
    $region9: #{tpu_custom_call.1} parent=1 // pred_fallthru
      _
    // Predicated region
    $region10: #{tpu_custom_call.1} parent=1 // pred_check
      _
    $region11: #{tpu_custom_call.1} parent=1 // pred_check_branch
      %39 = sbr.rel (0) target = $region13
    $region12: #{tpu_custom_call.1} parent=1 // pred_region
      %s41 = ssub.s32 64, 64
      %42 = vsyncadd [#allocation6], %s41
      %s44 = sshll.u32 [#allocation7], 4
      %s45 = int_to_ptr.vmem [resolvable:$true] %s44
      %47 = dma.hbm_to_vmem [thread:$0]  %s2, 64, %s45, [#allocation6]
    $region13: #{tpu_custom_call.1} parent=1 // pred_fallthru
      _
    // Predicated region
    $region14: #{tpu_custom_call.1} parent=1 // pred_check
      _
    $region15: #{tpu_custom_call.1} parent=1 // pred_check_branch
      %49 = sbr.rel (0) target = $region17
    $region16: #{tpu_custom_call.1} parent=1 // pred_region
      %s51 = ssub.s32 256, 256
      %52 = vsyncadd [#allocation9], %s51
      %s53 = sshll.u32 [#allocation8], 4
      %s54 = int_to_ptr.vmem [resolvable:$true] %s53
      %59 = dma.hbm_to_vmem [thread:$0]  %s3, 256, %s54, [#allocation9], 64, 64, 4
    $region17: #{tpu_custom_call.1} parent=1 // pred_fallthru
      _
    // Predicated region
    $region18: #{tpu_custom_call.1} parent=1 // pred_check
      _
    $region19: #{tpu_custom_call.1} parent=1 // pred_check_branch
      %61 = sbr.rel (0) target = $region21
    $region20: #{tpu_custom_call.1} parent=1 // pred_region
      _
    $region21: #{tpu_custom_call.1} parent=1 // pred_fallthru
      _
    // Predicated region
    $region22: #{tpu_custom_call.1} parent=1 // pred_check
      _
    $region23: #{tpu_custom_call.1} parent=1 // pred_check_branch
      %63 = sbr.rel (0) target = $region25
    $region24: #{tpu_custom_call.1} parent=1 // pred_region
      %64 = dma.done [#allocation3], 4096
    $region25: #{tpu_custom_call.1} parent=1 // pred_fallthru
      _
    // Predicated region
    $region26: #{tpu_custom_call.1} parent=1 // pred_check
      _
    $region27: #{tpu_custom_call.1} parent=1 // pred_check_branch
      %66 = sbr.rel (0) target = $region29
    $region28: #{tpu_custom_call.1} parent=1 // pred_region
      %67 = dma.done [#allocation6], 512
    $region29: #{tpu_custom_call.1} parent=1 // pred_fallthru
      _
    // Predicated region
    $region30: #{tpu_custom_call.1} parent=1 // pred_check
      _
    $region31: #{tpu_custom_call.1} parent=1 // pred_check_branch
      %69 = sbr.rel (0) target = $region33
    $region32: #{tpu_custom_call.1} parent=1 // pred_region
      %70 = dma.done [#allocation6], 64
    $region33: #{tpu_custom_call.1} parent=1 // pred_fallthru
      _
    // Predicated region
    $region34: #{tpu_custom_call.1} parent=1 // pred_check
      _
    $region35: #{tpu_custom_call.1} parent=1 // pred_check_branch
      %72 = sbr.rel (0) target = $region37
    $region36: #{tpu_custom_call.1} parent=1 // pred_region
      %73 = dma.done [#allocation9], 256
    $region37: #{tpu_custom_call.1} parent=1 // pred_fallthru
      _
    %v75 = vld [vmem:[#allocation2] sm:$0xf]
    %v76 = vld [vmem:[#allocation2 + $0x4] sm:$0xf]
    %v77 = vld [vmem:[#allocation2 + $0x8] sm:$0xf]
    %v78 = vld [vmem:[#allocation2 + $0xc] sm:$0xf]
    %v79 = vld [vmem:[#allocation2 + $0x10] sm:$0xf]
    %v80 = vld [vmem:[#allocation2 + $0x14] sm:$0xf]
    %v81 = vld [vmem:[#allocation2 + $0x18] sm:$0xf]
    %v82 = vld [vmem:[#allocation2 + $0x1c] sm:$0xf]
    %v83 = vld [vmem:[#allocation2 + $0x20] sm:$0xf]
    %v84 = vld [vmem:[#allocation2 + $0x24] sm:$0xf]
    %v85 = vld [vmem:[#allocation2 + $0x28] sm:$0xf]
    %v86 = vld [vmem:[#allocation2 + $0x2c] sm:$0xf]
    %v87 = vld [vmem:[#allocation2 + $0x30] sm:$0xf]
    %v88 = vld [vmem:[#allocation2 + $0x34] sm:$0xf]
    %v89 = vld [vmem:[#allocation2 + $0x38] sm:$0xf]
    %v90 = vld [vmem:[#allocation2 + $0x3c] sm:$0xf]
    %v91 = vld [vmem:[#allocation2 + $0x40] sm:$0xf]
    %v92 = vld [vmem:[#allocation2 + $0x44] sm:$0xf]
    %v93 = vld [vmem:[#allocation2 + $0x48] sm:$0xf]
    %v94 = vld [vmem:[#allocation2 + $0x4c] sm:$0xf]
    %v95 = vld [vmem:[#allocation2 + $0x50] sm:$0xf]
    %v96 = vld [vmem:[#allocation2 + $0x54] sm:$0xf]
    %v97 = vld [vmem:[#allocation2 + $0x58] sm:$0xf]
    %v98 = vld [vmem:[#allocation2 + $0x5c] sm:$0xf]
    %v99 = vld [vmem:[#allocation2 + $0x60] sm:$0xf]
    %v100 = vld [vmem:[#allocation2 + $0x64] sm:$0xf]
    %v101 = vld [vmem:[#allocation2 + $0x68] sm:$0xf]
    %v102 = vld [vmem:[#allocation2 + $0x6c] sm:$0xf]
    %v103 = vld [vmem:[#allocation2 + $0x70] sm:$0xf]
    %v104 = vld [vmem:[#allocation2 + $0x74] sm:$0xf]
    %v105 = vld [vmem:[#allocation2 + $0x78] sm:$0xf]
    %v106 = vld [vmem:[#allocation2 + $0x7c] sm:$0xf]
    %v107 = vld [vmem:[#allocation2 + $0x80] sm:$0xf]
    %v108 = vld [vmem:[#allocation2 + $0x84] sm:$0xf]
    %v109 = vld [vmem:[#allocation2 + $0x88] sm:$0xf]
    %v110 = vld [vmem:[#allocation2 + $0x8c] sm:$0xf]
    %v111 = vld [vmem:[#allocation2 + $0x90] sm:$0xf]
    %v112 = vld [vmem:[#allocation2 + $0x94] sm:$0xf]
    %v113 = vld [vmem:[#allocation2 + $0x98] sm:$0xf]
    %v114 = vld [vmem:[#allocation2 + $0x9c] sm:$0xf]
    %v115 = vld [vmem:[#allocation2 + $0xa0] sm:$0xf]
    %v116 = vld [vmem:[#allocation2 + $0xa4] sm:$0xf]
    %v117 = vld [vmem:[#allocation2 + $0xa8] sm:$0xf]
    %v118 = vld [vmem:[#allocation2 + $0xac] sm:$0xf]
    %v119 = vld [vmem:[#allocation2 + $0xb0] sm:$0xf]
    %v120 = vld [vmem:[#allocation2 + $0xb4] sm:$0xf]
    %v121 = vld [vmem:[#allocation2 + $0xb8] sm:$0xf]
    %v122 = vld [vmem:[#allocation2 + $0xbc] sm:$0xf]
    %v123 = vld [vmem:[#allocation2 + $0xc0] sm:$0xf]
    %v124 = vld [vmem:[#allocation2 + $0xc4] sm:$0xf]
    %v125 = vld [vmem:[#allocation2 + $0xc8] sm:$0xf]
    %v126 = vld [vmem:[#allocation2 + $0xcc] sm:$0xf]
    %v127 = vld [vmem:[#allocation2 + $0xd0] sm:$0xf]
    %v128 = vld [vmem:[#allocation2 + $0xd4] sm:$0xf]
    %v129 = vld [vmem:[#allocation2 + $0xd8] sm:$0xf]
    %v130 = vld [vmem:[#allocation2 + $0xdc] sm:$0xf]
    %v131 = vld [vmem:[#allocation2 + $0xe0] sm:$0xf]
    %v132 = vld [vmem:[#allocation2 + $0xe4] sm:$0xf]
    %v133 = vld [vmem:[#allocation2 + $0xe8] sm:$0xf]
    %v134 = vld [vmem:[#allocation2 + $0xec] sm:$0xf]
    %v135 = vld [vmem:[#allocation2 + $0xf0] sm:$0xf]
    %v136 = vld [vmem:[#allocation2 + $0xf4] sm:$0xf]
    %v137 = vld [vmem:[#allocation2 + $0xf8] sm:$0xf]
    %v138 = vld [vmem:[#allocation2 + $0xfc] sm:$0xf]
    %v139 = vld [vmem:[#allocation8] sm:$0xf]
    %v140 = vld [vmem:[#allocation8 + $0x4] sm:$0xf]
    %v141 = vld [vmem:[#allocation8 + $0x8] sm:$0xf]
    %v142 = vld [vmem:[#allocation8 + $0xc] sm:$0xf]
    %v207 = vunpack.c.l.b16 %v75
    %v208 = vunpack.c.l.b16 %v76
    %v209 = vunpack.c.l.b16 %v77
    %v210 = vunpack.c.l.b16 %v78
    %v211 = vunpack.c.l.b16 %v79
    %v212 = vunpack.c.l.b16 %v80
    %v213 = vunpack.c.l.b16 %v81
    %v214 = vunpack.c.l.b16 %v82
    %v215 = vunpack.c.l.b16 %v83
    %v216 = vunpack.c.l.b16 %v84
    %v217 = vunpack.c.l.b16 %v85
    %v218 = vunpack.c.l.b16 %v86
    %v219 = vunpack.c.l.b16 %v87
    %v220 = vunpack.c.l.b16 %v88
    %v221 = vunpack.c.l.b16 %v89
    %v222 = vunpack.c.l.b16 %v90
    %v223 = vunpack.c.l.b16 %v91
    %v224 = vunpack.c.l.b16 %v92
    %v225 = vunpack.c.l.b16 %v93
    %v226 = vunpack.c.l.b16 %v94
    %v227 = vunpack.c.l.b16 %v95
    %v228 = vunpack.c.l.b16 %v96
    %v229 = vunpack.c.l.b16 %v97
    %v230 = vunpack.c.l.b16 %v98
    %v231 = vunpack.c.l.b16 %v99
    %v232 = vunpack.c.l.b16 %v100
    %v233 = vunpack.c.l.b16 %v101
    %v234 = vunpack.c.l.b16 %v102
    %v235 = vunpack.c.l.b16 %v103
    %v236 = vunpack.c.l.b16 %v104
    %v237 = vunpack.c.l.b16 %v105
    %v238 = vunpack.c.l.b16 %v106
    %v239 = vunpack.c.l.b16 %v107
    %v240 = vunpack.c.l.b16 %v108
    %v241 = vunpack.c.l.b16 %v109
    %v242 = vunpack.c.l.b16 %v110
    %v243 = vunpack.c.l.b16 %v111
    %v244 = vunpack.c.l.b16 %v112
    %v245 = vunpack.c.l.b16 %v113
    %v246 = vunpack.c.l.b16 %v114
    %v247 = vunpack.c.l.b16 %v115
    %v248 = vunpack.c.l.b16 %v116
    %v249 = vunpack.c.l.b16 %v117
    %v250 = vunpack.c.l.b16 %v118
    %v251 = vunpack.c.l.b16 %v119
    %v252 = vunpack.c.l.b16 %v120
    %v253 = vunpack.c.l.b16 %v121
    %v254 = vunpack.c.l.b16 %v122
    %v255 = vunpack.c.l.b16 %v123
    %v256 = vunpack.c.l.b16 %v124
    %v257 = vunpack.c.l.b16 %v125
    %v258 = vunpack.c.l.b16 %v126
    %v259 = vunpack.c.l.b16 %v127
    %v260 = vunpack.c.l.b16 %v128
    %v261 = vunpack.c.l.b16 %v129
    %v262 = vunpack.c.l.b16 %v130
    %v263 = vunpack.c.l.b16 %v131
    %v264 = vunpack.c.l.b16 %v132
    %v265 = vunpack.c.l.b16 %v133
    %v266 = vunpack.c.l.b16 %v134
    %v267 = vunpack.c.l.b16 %v135
    %v268 = vunpack.c.l.b16 %v136
    %v269 = vunpack.c.l.b16 %v137
    %v270 = vunpack.c.l.b16 %v138
    %v271 = vpack.c.b16 %v208, %v207
    %v272 = vpack.c.b16 %v210, %v209
    %v273 = vpack.c.b16 %v212, %v211
    %v274 = vpack.c.b16 %v214, %v213
    %v275 = vpack.c.b16 %v216, %v215
    %v276 = vpack.c.b16 %v218, %v217
    %v277 = vpack.c.b16 %v220, %v219
    %v278 = vpack.c.b16 %v222, %v221
    %v279 = vpack.c.b16 %v224, %v223
    %v280 = vpack.c.b16 %v226, %v225
    %v281 = vpack.c.b16 %v228, %v227
    %v282 = vpack.c.b16 %v230, %v229
    %v283 = vpack.c.b16 %v232, %v231
    %v284 = vpack.c.b16 %v234, %v233
    %v285 = vpack.c.b16 %v236, %v235
    %v286 = vpack.c.b16 %v238, %v237
    %v287 = vpack.c.b16 %v240, %v239
    %v288 = vpack.c.b16 %v242, %v241
    %v289 = vpack.c.b16 %v244, %v243
    %v290 = vpack.c.b16 %v246, %v245
    %v291 = vpack.c.b16 %v248, %v247
    %v292 = vpack.c.b16 %v250, %v249
    %v293 = vpack.c.b16 %v252, %v251
    %v294 = vpack.c.b16 %v254, %v253
    %v295 = vpack.c.b16 %v256, %v255
    %v296 = vpack.c.b16 %v258, %v257
    %v297 = vpack.c.b16 %v260, %v259
    %v298 = vpack.c.b16 %v262, %v261
    %v299 = vpack.c.b16 %v264, %v263
    %v300 = vpack.c.b16 %v266, %v265
    %v301 = vpack.c.b16 %v268, %v267
    %v302 = vpack.c.b16 %v270, %v269
    %v307 = vunpack.c.l.b16 %v139
    %v308 = vunpack.c.l.b16 %v140
    %v309 = vunpack.c.l.b16 %v141
    %v310 = vunpack.c.l.b16 %v142
    %v311 = vpack.c.b16 %v308, %v307
    %v312 = vpack.c.b16 %v310, %v309
    %vm315 = vcmask 261120
    %v317 = vsel %vm315, %v271, 0
    %v320 = vsel %vm315, %v272, 0
    %v323 = vsel %vm315, %v273, 0
    %v326 = vsel %vm315, %v274, 0
    %v329 = vsel %vm315, %v275, 0
    %v332 = vsel %vm315, %v276, 0
    %v335 = vsel %vm315, %v277, 0
    %v338 = vsel %vm315, %v278, 0
    %v341 = vsel %vm315, %v279, 0
    %v344 = vsel %vm315, %v280, 0
    %v347 = vsel %vm315, %v281, 0
    %v350 = vsel %vm315, %v282, 0
    %v353 = vsel %vm315, %v283, 0
    %v356 = vsel %vm315, %v284, 0
    %v359 = vsel %vm315, %v285, 0
    %v362 = vsel %vm315, %v286, 0
    %v365 = vsel %vm315, %v287, 0
    %v368 = vsel %vm315, %v288, 0
    %v371 = vsel %vm315, %v289, 0
    %v374 = vsel %vm315, %v290, 0
    %v377 = vsel %vm315, %v291, 0
    %v380 = vsel %vm315, %v292, 0
    %v383 = vsel %vm315, %v293, 0
    %v386 = vsel %vm315, %v294, 0
    %v389 = vsel %vm315, %v295, 0
    %v392 = vsel %vm315, %v296, 0
    %v395 = vsel %vm315, %v297, 0
    %v398 = vsel %vm315, %v298, 0
    %v401 = vsel %vm315, %v299, 0
    %v404 = vsel %vm315, %v300, 0
    %v407 = vsel %vm315, %v301, 0
    %v410 = vsel %vm315, %v302, 0
    %412 = vmatprep.subr.bf16.mxu0 0
    %413 = vmatpush1.bf16.msra.mxu0 0
    %414 = vmatprep.subr.bf16.mxu0 0
    %415 = vmatpush1.bf16.msra.mxu0 0
    %416 = vmatprep.subr.bf16.mxu0 0
    %417 = vmatpush1.bf16.msra.mxu0 0
    %418 = vmatprep.subr.bf16.mxu0 0
    %419 = vmatpush1.bf16.msra.mxu0 0
    %420 = vmatprep.subr.bf16.mxu0 0
    %421 = vmatpush1.bf16.msra.mxu0 0
    %422 = vmatprep.subr.bf16.mxu0 0
    %423 = vmatpush1.bf16.msra.mxu0 0
    %424 = vmatprep.subr.bf16.mxu0 0
    %425 = vmatpush1.bf16.msra.mxu0 %v312
    %426 = vmatprep.subr.bf16.mxu0 0
    %427 = vmatpush1.bf16.msra.mxu0 %v311
    %428 = vmatprep.subr.bf16.mxu0 0
    %429 = vmatpush2.bf16.msra.mxu0 0
    %430 = vmatprep.subr.bf16.mxu0 0
    %431 = vmatpush2.bf16.msra.mxu0 0
    %432 = vmatprep.subr.bf16.mxu0 0
    %433 = vmatpush2.bf16.msra.mxu0 0
    %434 = vmatprep.subr.bf16.mxu0 0
    %435 = vmatpush2.bf16.msra.mxu0 0
    %436 = vmatprep.subr.bf16.mxu0 0
    %437 = vmatpush2.bf16.msra.mxu0 0
    %438 = vmatprep.subr.bf16.mxu0 0
    %439 = vmatpush2.bf16.msra.mxu0 0
    %440 = vmatprep.subr.bf16.mxu0 0
    %441 = vmatpush2.bf16.msra.mxu0 0
    %442 = vmatprep.subr.bf16.mxu0 0
    %443 = vmatpush2.bf16.msra.mxu0 0
    %444 = vmatprep.mubr.bf16.mxu0 0
    %445 = vmatmul.mubr.bf16.gmra.mxu0 %v317
    %v446 = vpop.f32.mrf.mxu0
    %v447 = vadd.f32 0.0, %v446
    %v448 = vpop.f32.mrf.mxu0
    %v449 = vpop.f32.mrf.mxu0
    %v450 = vadd.f32 0.0, %v449
    %v451 = vpop.f32.mrf.mxu0
    %452 = vmatprep.mubr.bf16.mxu0 0
    %453 = vmatmul.mubr.bf16.gmra.mxu0 %v320
    %v454 = vpop.f32.mrf.mxu0
    %v455 = vadd.f32 0.0, %v454
    %v456 = vpop.f32.mrf.mxu0
    %v457 = vpop.f32.mrf.mxu0
    %v458 = vadd.f32 0.0, %v457
    %v459 = vpop.f32.mrf.mxu0
    %460 = vmatprep.mubr.bf16.mxu0 0
    %461 = vmatmul.mubr.bf16.gmra.mxu0 %v323
    %v462 = vpop.f32.mrf.mxu0
    %v463 = vadd.f32 0.0, %v462
    %v464 = vpop.f32.mrf.mxu0
    %v465 = vpop.f32.mrf.mxu0
    %v466 = vadd.f32 0.0, %v465
    %v467 = vpop.f32.mrf.mxu0
    %468 = vmatprep.mubr.bf16.mxu0 0
    %469 = vmatmul.mubr.bf16.gmra.mxu0 %v326
    %v470 = vpop.f32.mrf.mxu0
    %v471 = vadd.f32 0.0, %v470
    %v472 = vpop.f32.mrf.mxu0
    %v473 = vpop.f32.mrf.mxu0
    %v474 = vadd.f32 0.0, %v473
    %v475 = vpop.f32.mrf.mxu0
    %476 = vmatprep.mubr.bf16.mxu0 0
    %477 = vmatmul.mubr.bf16.gmra.mxu0 %v329
    %v478 = vpop.f32.mrf.mxu0
    %v479 = vadd.f32 0.0, %v478
    %v480 = vpop.f32.mrf.mxu0
    %v481 = vpop.f32.mrf.mxu0
    %v482 = vadd.f32 0.0, %v481
    %v483 = vpop.f32.mrf.mxu0
    %484 = vmatprep.mubr.bf16.mxu0 0
    %485 = vmatmul.mubr.bf16.gmra.mxu0 %v332
    %v486 = vpop.f32.mrf.mxu0
    %v487 = vadd.f32 0.0, %v486
    %v488 = vpop.f32.mrf.mxu0
    %v489 = vpop.f32.mrf.mxu0
    %v490 = vadd.f32 0.0, %v489
    %v491 = vpop.f32.mrf.mxu0
    %492 = vmatprep.mubr.bf16.mxu0 0
    %493 = vmatmul.mubr.bf16.gmra.mxu0 %v335
    %v494 = vpop.f32.mrf.mxu0
    %v495 = vadd.f32 0.0, %v494
    %v496 = vpop.f32.mrf.mxu0
    %v497 = vpop.f32.mrf.mxu0
    %v498 = vadd.f32 0.0, %v497
    %v499 = vpop.f32.mrf.mxu0
    %500 = vmatprep.mubr.bf16.mxu0 0
    %501 = vmatmul.mubr.bf16.gmra.mxu0 %v338
    %v502 = vpop.f32.mrf.mxu0
    %v503 = vadd.f32 0.0, %v502
    %v504 = vpop.f32.mrf.mxu0
    %v505 = vpop.f32.mrf.mxu0
    %v506 = vadd.f32 0.0, %v505
    %v507 = vpop.f32.mrf.mxu0
    %508 = vmatprep.mubr.bf16.mxu0 0
    %509 = vmatmul.mubr.bf16.gmra.mxu0 %v341
    %v510 = vpop.f32.mrf.mxu0
    %v511 = vadd.f32 0.0, %v510
    %v512 = vpop.f32.mrf.mxu0
    %v513 = vpop.f32.mrf.mxu0
    %v514 = vadd.f32 0.0, %v513
    %v515 = vpop.f32.mrf.mxu0
    %516 = vmatprep.mubr.bf16.mxu0 0
    %517 = vmatmul.mubr.bf16.gmra.mxu0 %v344
    %v518 = vpop.f32.mrf.mxu0
    %v519 = vadd.f32 0.0, %v518
    %v520 = vpop.f32.mrf.mxu0
    %v521 = vpop.f32.mrf.mxu0
    %v522 = vadd.f32 0.0, %v521
    %v523 = vpop.f32.mrf.mxu0
    %524 = vmatprep.mubr.bf16.mxu0 0
    %525 = vmatmul.mubr.bf16.gmra.mxu0 %v347
    %v526 = vpop.f32.mrf.mxu0
    %v527 = vadd.f32 0.0, %v526
    %v528 = vpop.f32.mrf.mxu0
    %v529 = vpop.f32.mrf.mxu0
    %v530 = vadd.f32 0.0, %v529
    %v531 = vpop.f32.mrf.mxu0
    %532 = vmatprep.mubr.bf16.mxu0 0
    %533 = vmatmul.mubr.bf16.gmra.mxu0 %v350
    %v534 = vpop.f32.mrf.mxu0
    %v535 = vadd.f32 0.0, %v534
    %v536 = vpop.f32.mrf.mxu0
    %v537 = vpop.f32.mrf.mxu0
    %v538 = vadd.f32 0.0, %v537
    %v539 = vpop.f32.mrf.mxu0
    %540 = vmatprep.mubr.bf16.mxu0 0
    %541 = vmatmul.mubr.bf16.gmra.mxu0 %v353
    %v542 = vpop.f32.mrf.mxu0
    %v543 = vadd.f32 0.0, %v542
    %v544 = vpop.f32.mrf.mxu0
    %v545 = vpop.f32.mrf.mxu0
    %v546 = vadd.f32 0.0, %v545
    %v547 = vpop.f32.mrf.mxu0
    %548 = vmatprep.mubr.bf16.mxu0 0
    %549 = vmatmul.mubr.bf16.gmra.mxu0 %v356
    %v550 = vpop.f32.mrf.mxu0
    %v551 = vadd.f32 0.0, %v550
    %v552 = vpop.f32.mrf.mxu0
    %v553 = vpop.f32.mrf.mxu0
    %v554 = vadd.f32 0.0, %v553
    %v555 = vpop.f32.mrf.mxu0
    %556 = vmatprep.mubr.bf16.mxu0 0
    %557 = vmatmul.mubr.bf16.gmra.mxu0 %v359
    %v558 = vpop.f32.mrf.mxu0
    %v559 = vadd.f32 0.0, %v558
    %v560 = vpop.f32.mrf.mxu0
    %v561 = vpop.f32.mrf.mxu0
    %v562 = vadd.f32 0.0, %v561
    %v563 = vpop.f32.mrf.mxu0
    %564 = vmatprep.mubr.bf16.mxu0 0
    %565 = vmatmul.mubr.bf16.gmra.mxu0 %v362
    %v566 = vpop.f32.mrf.mxu0
    %v567 = vadd.f32 0.0, %v566
    %v568 = vpop.f32.mrf.mxu0
    %v569 = vpop.f32.mrf.mxu0
    %v570 = vadd.f32 0.0, %v569
    %v571 = vpop.f32.mrf.mxu0
    %572 = vmatprep.mubr.bf16.mxu0 0
    %573 = vmatmul.mubr.bf16.gmra.mxu0 %v365
    %v574 = vpop.f32.mrf.mxu0
    %v575 = vadd.f32 0.0, %v574
    %v576 = vpop.f32.mrf.mxu0
    %v577 = vpop.f32.mrf.mxu0
    %v578 = vadd.f32 0.0, %v577
    %v579 = vpop.f32.mrf.mxu0
    %580 = vmatprep.mubr.bf16.mxu0 0
    %581 = vmatmul.mubr.bf16.gmra.mxu0 %v368
    %v582 = vpop.f32.mrf.mxu0
    %v583 = vadd.f32 0.0, %v582
    %v584 = vpop.f32.mrf.mxu0
    %v585 = vpop.f32.mrf.mxu0
    %v586 = vadd.f32 0.0, %v585
    %v587 = vpop.f32.mrf.mxu0
    %588 = vmatprep.mubr.bf16.mxu0 0
    %589 = vmatmul.mubr.bf16.gmra.mxu0 %v371
    %v590 = vpop.f32.mrf.mxu0
    %v591 = vadd.f32 0.0, %v590
    %v592 = vpop.f32.mrf.mxu0
    %v593 = vpop.f32.mrf.mxu0
    %v594 = vadd.f32 0.0, %v593
    %v595 = vpop.f32.mrf.mxu0
    %596 = vmatprep.mubr.bf16.mxu0 0
    %597 = vmatmul.mubr.bf16.gmra.mxu0 %v374
    %v598 = vpop.f32.mrf.mxu0
    %v599 = vadd.f32 0.0, %v598
    %v600 = vpop.f32.mrf.mxu0
    %v601 = vpop.f32.mrf.mxu0
    %v602 = vadd.f32 0.0, %v601
    %v603 = vpop.f32.mrf.mxu0
    %604 = vmatprep.mubr.bf16.mxu0 0
    %605 = vmatmul.mubr.bf16.gmra.mxu0 %v377
    %v606 = vpop.f32.mrf.mxu0
    %v607 = vadd.f32 0.0, %v606
    %v608 = vpop.f32.mrf.mxu0
    %v609 = vpop.f32.mrf.mxu0
    %v610 = vadd.f32 0.0, %v609
    %v611 = vpop.f32.mrf.mxu0
    %612 = vmatprep.mubr.bf16.mxu0 0
    %613 = vmatmul.mubr.bf16.gmra.mxu0 %v380
    %v614 = vpop.f32.mrf.mxu0
    %v615 = vadd.f32 0.0, %v614
    %v616 = vpop.f32.mrf.mxu0
    %v617 = vpop.f32.mrf.mxu0
    %v618 = vadd.f32 0.0, %v617
    %v619 = vpop.f32.mrf.mxu0
    %620 = vmatprep.mubr.bf16.mxu0 0
    %621 = vmatmul.mubr.bf16.gmra.mxu0 %v383
    %v622 = vpop.f32.mrf.mxu0
    %v623 = vadd.f32 0.0, %v622
    %v624 = vpop.f32.mrf.mxu0
    %v625 = vpop.f32.mrf.mxu0
    %v626 = vadd.f32 0.0, %v625
    %v627 = vpop.f32.mrf.mxu0
    %628 = vmatprep.mubr.bf16.mxu0 0
    %629 = vmatmul.mubr.bf16.gmra.mxu0 %v386
    %v630 = vpop.f32.mrf.mxu0
    %v631 = vadd.f32 0.0, %v630
    %v632 = vpop.f32.mrf.mxu0
    %v633 = vpop.f32.mrf.mxu0
    %v634 = vadd.f32 0.0, %v633
    %v635 = vpop.f32.mrf.mxu0
    %636 = vmatprep.mubr.bf16.mxu0 0
    %637 = vmatmul.mubr.bf16.gmra.mxu0 %v389
    %v638 = vpop.f32.mrf.mxu0
    %v639 = vadd.f32 0.0, %v638
    %v640 = vpop.f32.mrf.mxu0
    %v641 = vpop.f32.mrf.mxu0
    %v642 = vadd.f32 0.0, %v641
    %v643 = vpop.f32.mrf.mxu0
    %644 = vmatprep.mubr.bf16.mxu0 0
    %645 = vmatmul.mubr.bf16.gmra.mxu0 %v392
    %v646 = vpop.f32.mrf.mxu0
    %v647 = vadd.f32 0.0, %v646
    %v648 = vpop.f32.mrf.mxu0
    %v649 = vpop.f32.mrf.mxu0
    %v650 = vadd.f32 0.0, %v649
    %v651 = vpop.f32.mrf.mxu0
    %652 = vmatprep.mubr.bf16.mxu0 0
    %653 = vmatmul.mubr.bf16.gmra.mxu0 %v395
    %v654 = vpop.f32.mrf.mxu0
    %v655 = vadd.f32 0.0, %v654
    %v656 = vpop.f32.mrf.mxu0
    %v657 = vpop.f32.mrf.mxu0
    %v658 = vadd.f32 0.0, %v657
    %v659 = vpop.f32.mrf.mxu0
    %660 = vmatprep.mubr.bf16.mxu0 0
    %661 = vmatmul.mubr.bf16.gmra.mxu0 %v398
    %v662 = vpop.f32.mrf.mxu0
    %v663 = vadd.f32 0.0, %v662
    %v664 = vpop.f32.mrf.mxu0
    %v665 = vpop.f32.mrf.mxu0
    %v666 = vadd.f32 0.0, %v665
    %v667 = vpop.f32.mrf.mxu0
    %668 = vmatprep.mubr.bf16.mxu0 0
    %669 = vmatmul.mubr.bf16.gmra.mxu0 %v401
    %v670 = vpop.f32.mrf.mxu0
    %v671 = vadd.f32 0.0, %v670
    %v672 = vpop.f32.mrf.mxu0
    %v673 = vpop.f32.mrf.mxu0
    %v674 = vadd.f32 0.0, %v673
    %v675 = vpop.f32.mrf.mxu0
    %676 = vmatprep.mubr.bf16.mxu0 0
    %677 = vmatmul.mubr.bf16.gmra.mxu0 %v404
    %v678 = vpop.f32.mrf.mxu0
    %v679 = vadd.f32 0.0, %v678
    %v680 = vpop.f32.mrf.mxu0
    %v681 = vpop.f32.mrf.mxu0
    %v682 = vadd.f32 0.0, %v681
    %v683 = vpop.f32.mrf.mxu0
    %684 = vmatprep.mubr.bf16.mxu0 0
    %685 = vmatmul.mubr.bf16.gmra.mxu0 %v407
    %v686 = vpop.f32.mrf.mxu0
    %v687 = vadd.f32 0.0, %v686
    %v688 = vpop.f32.mrf.mxu0
    %v689 = vpop.f32.mrf.mxu0
    %v690 = vadd.f32 0.0, %v689
    %v691 = vpop.f32.mrf.mxu0
    %692 = vmatprep.mubr.bf16.mxu0 0
    %693 = vmatmul.mubr.bf16.gmra.mxu0 %v410
    %v694 = vpop.f32.mrf.mxu0
    %v695 = vadd.f32 0.0, %v694
    %v696 = vpop.f32.mrf.mxu0
    %v697 = vpop.f32.mrf.mxu0
    %v698 = vadd.f32 0.0, %v697
    %v699 = vpop.f32.mrf.mxu0
    %700 = vdwg.mxu0
    %v701 = vld [vmem:[#allocation7] sm:$0xf]
    %v704 = vunpack.c.l.s4 1966171168
    %v705 = vunpack.c.0.s8 %v704
    %v706 = vlaneseq
    %v707 = vshrl.u32 %v706, 7
    %v708 = vsub.s32 %v705, %v707
    %v709 = vrot.slane %v701, %v708
    %v710 = vcombine.high %v709, %v709
    %v712 = vunpack.c.l.s4 1966171168
    %v713 = vunpack.c.0.s8 %v712
    %v714 = vlaneseq
    %v715 = vshrl.u32 %v714, 7
    %v716 = vsub.s32 %v713, %v715
    %v717 = vrot.slane %v709, %v716
    %v719 = vunpack.c.l.s4 1966171168
    %v720 = vunpack.c.0.s8 %v719
    %v721 = vlaneseq
    %v722 = vshrl.u32 %v721, 7
    %v723 = vsub.s32 %v720, %v722
    %v724 = vrot.slane %v710, %v723
    %v725 = vcombine.high %v717, %v717
    %v726 = vcombine.high %v724, %v724
    %v727 = vlaneseq
    %v728 = vshrl.u32 %v727, 7
    %v729 = vsub.s32 0, %v728
    %v730 = vrot.slane %v717, %v729
    %v731 = vlaneseq
    %v732 = vshrl.u32 %v731, 7
    %v733 = vsub.s32 0, %v732
    %v734 = vrot.slane %v724, %v733
    %v735 = vlaneseq
    %v736 = vshrl.u32 %v735, 7
    %v737 = vsub.s32 0, %v736
    %v738 = vrot.slane %v725, %v737
    %v739 = vlaneseq
    %v740 = vshrl.u32 %v739, 7
    %v741 = vsub.s32 0, %v740
    %v742 = vrot.slane %v726, %v741
    %v747 = vadd.f32 %v447, %v730
    %v748 = vadd.f32 %v450, %v730
    %v749 = vadd.f32 %v455, %v730
    %v750 = vadd.f32 %v458, %v730
    %v751 = vadd.f32 %v463, %v730
    %v752 = vadd.f32 %v466, %v730
    %v753 = vadd.f32 %v471, %v730
    %v754 = vadd.f32 %v474, %v730
    %v755 = vadd.f32 %v479, %v730
    %v756 = vadd.f32 %v482, %v730
    %v757 = vadd.f32 %v487, %v730
    %v758 = vadd.f32 %v490, %v730
    %v759 = vadd.f32 %v495, %v730
    %v760 = vadd.f32 %v498, %v730
    %v761 = vadd.f32 %v503, %v730
    %v762 = vadd.f32 %v506, %v730
    %v763 = vadd.f32 %v511, %v734
    %v764 = vadd.f32 %v514, %v734
    %v765 = vadd.f32 %v519, %v734
    %v766 = vadd.f32 %v522, %v734
    %v767 = vadd.f32 %v527, %v734
    %v768 = vadd.f32 %v530, %v734
    %v769 = vadd.f32 %v535, %v734
    %v770 = vadd.f32 %v538, %v734
    %v771 = vadd.f32 %v543, %v734
    %v772 = vadd.f32 %v546, %v734
    %v773 = vadd.f32 %v551, %v734
    %v774 = vadd.f32 %v554, %v734
    %v775 = vadd.f32 %v559, %v734
    %v776 = vadd.f32 %v562, %v734
    %v777 = vadd.f32 %v567, %v734
    %v778 = vadd.f32 %v570, %v734
    %v779 = vadd.f32 %v575, %v738
    %v780 = vadd.f32 %v578, %v738
    %v781 = vadd.f32 %v583, %v738
    %v782 = vadd.f32 %v586, %v738
    %v783 = vadd.f32 %v591, %v738
    %v784 = vadd.f32 %v594, %v738
    %v785 = vadd.f32 %v599, %v738
    %v786 = vadd.f32 %v602, %v738
    %v787 = vadd.f32 %v607, %v738
    %v788 = vadd.f32 %v610, %v738
    %v789 = vadd.f32 %v615, %v738
    %v790 = vadd.f32 %v618, %v738
    %v791 = vadd.f32 %v623, %v738
    %v792 = vadd.f32 %v626, %v738
    %v793 = vadd.f32 %v631, %v738
    %v794 = vadd.f32 %v634, %v738
    %v795 = vadd.f32 %v639, %v742
    %v796 = vadd.f32 %v642, %v742
    %v797 = vadd.f32 %v647, %v742
    %v798 = vadd.f32 %v650, %v742
    %v799 = vadd.f32 %v655, %v742
    %v800 = vadd.f32 %v658, %v742
    %v801 = vadd.f32 %v663, %v742
    %v802 = vadd.f32 %v666, %v742
    %v803 = vadd.f32 %v671, %v742
    %v804 = vadd.f32 %v674, %v742
    %v805 = vadd.f32 %v679, %v742
    %v806 = vadd.f32 %v682, %v742
    %v807 = vadd.f32 %v687, %v742
    %v808 = vadd.f32 %v690, %v742
    %v809 = vadd.f32 %v695, %v742
    %v810 = vadd.f32 %v698, %v742
    %v811 = vtanh.pop %v747
    %v812 = vtanh.pop %v748
    %v813 = vtanh.pop %v749
    %v814 = vtanh.pop %v750
    %v815 = vtanh.pop %v751
    %v816 = vtanh.pop %v752
    %v817 = vtanh.pop %v753
    %v818 = vtanh.pop %v754
    %v819 = vtanh.pop %v755
    %v820 = vtanh.pop %v756
    %v821 = vtanh.pop %v757
    %v822 = vtanh.pop %v758
    %v823 = vtanh.pop %v759
    %v824 = vtanh.pop %v760
    %v825 = vtanh.pop %v761
    %v826 = vtanh.pop %v762
    %v827 = vtanh.pop %v763
    %v828 = vtanh.pop %v764
    %v829 = vtanh.pop %v765
    %v830 = vtanh.pop %v766
    %v831 = vtanh.pop %v767
    %v832 = vtanh.pop %v768
    %v833 = vtanh.pop %v769
    %v834 = vtanh.pop %v770
    %v835 = vtanh.pop %v771
    %v836 = vtanh.pop %v772
    %v837 = vtanh.pop %v773
    %v838 = vtanh.pop %v774
    %v839 = vtanh.pop %v775
    %v840 = vtanh.pop %v776
    %v841 = vtanh.pop %v777
    %v842 = vtanh.pop %v778
    %v843 = vtanh.pop %v779
    %v844 = vtanh.pop %v780
    %v845 = vtanh.pop %v781
    %v846 = vtanh.pop %v782
    %v847 = vtanh.pop %v783
    %v848 = vtanh.pop %v784
    %v849 = vtanh.pop %v785
    %v850 = vtanh.pop %v786
    %v851 = vtanh.pop %v787
    %v852 = vtanh.pop %v788
    %v853 = vtanh.pop %v789
    %v854 = vtanh.pop %v790
    %v855 = vtanh.pop %v791
    %v856 = vtanh.pop %v792
    %v857 = vtanh.pop %v793
    %v858 = vtanh.pop %v794
    %v859 = vtanh.pop %v795
    %v860 = vtanh.pop %v796
    %v861 = vtanh.pop %v797
    %v862 = vtanh.pop %v798
    %v863 = vtanh.pop %v799
    %v864 = vtanh.pop %v800
    %v865 = vtanh.pop %v801
    %v866 = vtanh.pop %v802
    %v867 = vtanh.pop %v803
    %v868 = vtanh.pop %v804
    %v869 = vtanh.pop %v805
    %v870 = vtanh.pop %v806
    %v871 = vtanh.pop %v807
    %v872 = vtanh.pop %v808
    %v873 = vtanh.pop %v809
    %v874 = vtanh.pop %v810
    %v875 = vld [vmem:[%s4] sm:$0x1]
    %v877 = vlaneseq
    %v878 = vshrl.u32 %v877, 7
    %v879 = vsub.s32 0, %v878
    %v880 = vrot.slane %v875, %v879
    %v882 = vmul.f32 %v811, %v880
    %v883 = vmul.f32 %v812, %v880
    %v884 = vmul.f32 %v813, %v880
    %v885 = vmul.f32 %v814, %v880
    %v886 = vmul.f32 %v815, %v880
    %v887 = vmul.f32 %v816, %v880
    %v888 = vmul.f32 %v817, %v880
    %v889 = vmul.f32 %v818, %v880
    %v890 = vmul.f32 %v819, %v880
    %v891 = vmul.f32 %v820, %v880
    %v892 = vmul.f32 %v821, %v880
    %v893 = vmul.f32 %v822, %v880
    %v894 = vmul.f32 %v823, %v880
    %v895 = vmul.f32 %v824, %v880
    %v896 = vmul.f32 %v825, %v880
    %v897 = vmul.f32 %v826, %v880
    %v898 = vmul.f32 %v827, %v880
    %v899 = vmul.f32 %v828, %v880
    %v900 = vmul.f32 %v829, %v880
    %v901 = vmul.f32 %v830, %v880
    %v902 = vmul.f32 %v831, %v880
    %v903 = vmul.f32 %v832, %v880
    %v904 = vmul.f32 %v833, %v880
    %v905 = vmul.f32 %v834, %v880
    %v906 = vmul.f32 %v835, %v880
    %v907 = vmul.f32 %v836, %v880
    %v908 = vmul.f32 %v837, %v880
    %v909 = vmul.f32 %v838, %v880
    %v910 = vmul.f32 %v839, %v880
    %v911 = vmul.f32 %v840, %v880
    %v912 = vmul.f32 %v841, %v880
    %v913 = vmul.f32 %v842, %v880
    %v914 = vmul.f32 %v843, %v880
    %v915 = vmul.f32 %v844, %v880
    %v916 = vmul.f32 %v845, %v880
    %v917 = vmul.f32 %v846, %v880
    %v918 = vmul.f32 %v847, %v880
    %v919 = vmul.f32 %v848, %v880
    %v920 = vmul.f32 %v849, %v880
    %v921 = vmul.f32 %v850, %v880
    %v922 = vmul.f32 %v851, %v880
    %v923 = vmul.f32 %v852, %v880
    %v924 = vmul.f32 %v853, %v880
    %v925 = vmul.f32 %v854, %v880
    %v926 = vmul.f32 %v855, %v880
    %v927 = vmul.f32 %v856, %v880
    %v928 = vmul.f32 %v857, %v880
    %v929 = vmul.f32 %v858, %v880
    %v930 = vmul.f32 %v859, %v880
    %v931 = vmul.f32 %v860, %v880
    %v932 = vmul.f32 %v861, %v880
    %v933 = vmul.f32 %v862, %v880
    %v934 = vmul.f32 %v863, %v880
    %v935 = vmul.f32 %v864, %v880
    %v936 = vmul.f32 %v865, %v880
    %v937 = vmul.f32 %v866, %v880
    %v938 = vmul.f32 %v867, %v880
    %v939 = vmul.f32 %v868, %v880
    %v940 = vmul.f32 %v869, %v880
    %v941 = vmul.f32 %v870, %v880
    %v942 = vmul.f32 %v871, %v880
    %v943 = vmul.f32 %v872, %v880
    %v944 = vmul.f32 %v873, %v880
    %v945 = vmul.f32 %v874, %v880
    %v946 = vsel %vm315, %v882, 0.0
    %947 = vadd.xlane.f32.xlu0 %v946
    %v948 = vpop.xlane.xlu0 %947
    %v949 = vsel %vm315, %v883, 0.0
    %950 = vadd.xlane.f32.xlu0 %v949
    %v951 = vpop.xlane.xlu0 %950
    %v952 = vsel %vm315, %v884, 0.0
    %953 = vadd.xlane.f32.xlu0 %v952
    %v954 = vpop.xlane.xlu0 %953
    %v955 = vsel %vm315, %v885, 0.0
    %956 = vadd.xlane.f32.xlu0 %v955
    %v957 = vpop.xlane.xlu0 %956
    %v958 = vsel %vm315, %v886, 0.0
    %959 = vadd.xlane.f32.xlu0 %v958
    %v960 = vpop.xlane.xlu0 %959
    %v961 = vsel %vm315, %v887, 0.0
    %962 = vadd.xlane.f32.xlu0 %v961
    %v963 = vpop.xlane.xlu0 %962
    %v964 = vsel %vm315, %v888, 0.0
    %965 = vadd.xlane.f32.xlu0 %v964
    %v966 = vpop.xlane.xlu0 %965
    %v967 = vsel %vm315, %v889, 0.0
    %968 = vadd.xlane.f32.xlu0 %v967
    %v969 = vpop.xlane.xlu0 %968
    %v970 = vsel %vm315, %v890, 0.0
    %971 = vadd.xlane.f32.xlu0 %v970
    %v972 = vpop.xlane.xlu0 %971
    %v973 = vsel %vm315, %v891, 0.0
    %974 = vadd.xlane.f32.xlu0 %v973
    %v975 = vpop.xlane.xlu0 %974
    %v976 = vsel %vm315, %v892, 0.0
    %977 = vadd.xlane.f32.xlu0 %v976
    %v978 = vpop.xlane.xlu0 %977
    %v979 = vsel %vm315, %v893, 0.0
    %980 = vadd.xlane.f32.xlu0 %v979
    %v981 = vpop.xlane.xlu0 %980
    %v982 = vsel %vm315, %v894, 0.0
    %983 = vadd.xlane.f32.xlu0 %v982
    %v984 = vpop.xlane.xlu0 %983
    %v985 = vsel %vm315, %v895, 0.0
    %986 = vadd.xlane.f32.xlu0 %v985
    %v987 = vpop.xlane.xlu0 %986
    %v988 = vsel %vm315, %v896, 0.0
    %989 = vadd.xlane.f32.xlu0 %v988
    %v990 = vpop.xlane.xlu0 %989
    %v991 = vsel %vm315, %v897, 0.0
    %992 = vadd.xlane.f32.xlu0 %v991
    %v993 = vpop.xlane.xlu0 %992
    %v994 = vsel %vm315, %v898, 0.0
    %995 = vadd.xlane.f32.xlu0 %v994
    %v996 = vpop.xlane.xlu0 %995
    %v997 = vsel %vm315, %v899, 0.0
    %998 = vadd.xlane.f32.xlu0 %v997
    %v999 = vpop.xlane.xlu0 %998
    %v1000 = vsel %vm315, %v900, 0.0
    %1001 = vadd.xlane.f32.xlu0 %v1000
    %v1002 = vpop.xlane.xlu0 %1001
    %v1003 = vsel %vm315, %v901, 0.0
    %1004 = vadd.xlane.f32.xlu0 %v1003
    %v1005 = vpop.xlane.xlu0 %1004
    %v1006 = vsel %vm315, %v902, 0.0
    %1007 = vadd.xlane.f32.xlu0 %v1006
    %v1008 = vpop.xlane.xlu0 %1007
    %v1009 = vsel %vm315, %v903, 0.0
    %1010 = vadd.xlane.f32.xlu0 %v1009
    %v1011 = vpop.xlane.xlu0 %1010
    %v1012 = vsel %vm315, %v904, 0.0
    %1013 = vadd.xlane.f32.xlu0 %v1012
    %v1014 = vpop.xlane.xlu0 %1013
    %v1015 = vsel %vm315, %v905, 0.0
    %1016 = vadd.xlane.f32.xlu0 %v1015
    %v1017 = vpop.xlane.xlu0 %1016
    %v1018 = vsel %vm315, %v906, 0.0
    %1019 = vadd.xlane.f32.xlu0 %v1018
    %v1020 = vpop.xlane.xlu0 %1019
    %v1021 = vsel %vm315, %v907, 0.0
    %1022 = vadd.xlane.f32.xlu0 %v1021
    %v1023 = vpop.xlane.xlu0 %1022
    %v1024 = vsel %vm315, %v908, 0.0
    %1025 = vadd.xlane.f32.xlu0 %v1024
    %v1026 = vpop.xlane.xlu0 %1025
    %v1027 = vsel %vm315, %v909, 0.0
    %1028 = vadd.xlane.f32.xlu0 %v1027
    %v1029 = vpop.xlane.xlu0 %1028
    %v1030 = vsel %vm315, %v910, 0.0
    %1031 = vadd.xlane.f32.xlu0 %v1030
    %v1032 = vpop.xlane.xlu0 %1031
    %v1033 = vsel %vm315, %v911, 0.0
    %1034 = vadd.xlane.f32.xlu0 %v1033
    %v1035 = vpop.xlane.xlu0 %1034
    %v1036 = vsel %vm315, %v912, 0.0
    %1037 = vadd.xlane.f32.xlu0 %v1036
    %v1038 = vpop.xlane.xlu0 %1037
    %v1039 = vsel %vm315, %v913, 0.0
    %1040 = vadd.xlane.f32.xlu0 %v1039
    %v1041 = vpop.xlane.xlu0 %1040
    %v1042 = vsel %vm315, %v914, 0.0
    %1043 = vadd.xlane.f32.xlu0 %v1042
    %v1044 = vpop.xlane.xlu0 %1043
    %v1045 = vsel %vm315, %v915, 0.0
    %1046 = vadd.xlane.f32.xlu0 %v1045
    %v1047 = vpop.xlane.xlu0 %1046
    %v1048 = vsel %vm315, %v916, 0.0
    %1049 = vadd.xlane.f32.xlu0 %v1048
    %v1050 = vpop.xlane.xlu0 %1049
    %v1051 = vsel %vm315, %v917, 0.0
    %1052 = vadd.xlane.f32.xlu0 %v1051
    %v1053 = vpop.xlane.xlu0 %1052
    %v1054 = vsel %vm315, %v918, 0.0
    %1055 = vadd.xlane.f32.xlu0 %v1054
    %v1056 = vpop.xlane.xlu0 %1055
    %v1057 = vsel %vm315, %v919, 0.0
    %1058 = vadd.xlane.f32.xlu0 %v1057
    %v1059 = vpop.xlane.xlu0 %1058
    %v1060 = vsel %vm315, %v920, 0.0
    %1061 = vadd.xlane.f32.xlu0 %v1060
    %v1062 = vpop.xlane.xlu0 %1061
    %v1063 = vsel %vm315, %v921, 0.0
    %1064 = vadd.xlane.f32.xlu0 %v1063
    %v1065 = vpop.xlane.xlu0 %1064
    %v1066 = vsel %vm315, %v922, 0.0
    %1067 = vadd.xlane.f32.xlu0 %v1066
    %v1068 = vpop.xlane.xlu0 %1067
    %v1069 = vsel %vm315, %v923, 0.0
    %1070 = vadd.xlane.f32.xlu0 %v1069
    %v1071 = vpop.xlane.xlu0 %1070
    %v1072 = vsel %vm315, %v924, 0.0
    %1073 = vadd.xlane.f32.xlu0 %v1072
    %v1074 = vpop.xlane.xlu0 %1073
    %v1075 = vsel %vm315, %v925, 0.0
    %1076 = vadd.xlane.f32.xlu0 %v1075
    %v1077 = vpop.xlane.xlu0 %1076
    %v1078 = vsel %vm315, %v926, 0.0
    %1079 = vadd.xlane.f32.xlu0 %v1078
    %v1080 = vpop.xlane.xlu0 %1079
    %v1081 = vsel %vm315, %v927, 0.0
    %1082 = vadd.xlane.f32.xlu0 %v1081
    %v1083 = vpop.xlane.xlu0 %1082
    %v1084 = vsel %vm315, %v928, 0.0
    %1085 = vadd.xlane.f32.xlu0 %v1084
    %v1086 = vpop.xlane.xlu0 %1085
    %v1087 = vsel %vm315, %v929, 0.0
    %1088 = vadd.xlane.f32.xlu0 %v1087
    %v1089 = vpop.xlane.xlu0 %1088
    %v1090 = vsel %vm315, %v930, 0.0
    %1091 = vadd.xlane.f32.xlu0 %v1090
    %v1092 = vpop.xlane.xlu0 %1091
    %v1093 = vsel %vm315, %v931, 0.0
    %1094 = vadd.xlane.f32.xlu0 %v1093
    %v1095 = vpop.xlane.xlu0 %1094
    %v1096 = vsel %vm315, %v932, 0.0
    %1097 = vadd.xlane.f32.xlu0 %v1096
    %v1098 = vpop.xlane.xlu0 %1097
    %v1099 = vsel %vm315, %v933, 0.0
    %1100 = vadd.xlane.f32.xlu0 %v1099
    %v1101 = vpop.xlane.xlu0 %1100
    %v1102 = vsel %vm315, %v934, 0.0
    %1103 = vadd.xlane.f32.xlu0 %v1102
    %v1104 = vpop.xlane.xlu0 %1103
    %v1105 = vsel %vm315, %v935, 0.0
    %1106 = vadd.xlane.f32.xlu0 %v1105
    %v1107 = vpop.xlane.xlu0 %1106
    %v1108 = vsel %vm315, %v936, 0.0
    %1109 = vadd.xlane.f32.xlu0 %v1108
    %v1110 = vpop.xlane.xlu0 %1109
    %v1111 = vsel %vm315, %v937, 0.0
    %1112 = vadd.xlane.f32.xlu0 %v1111
    %v1113 = vpop.xlane.xlu0 %1112
    %v1114 = vsel %vm315, %v938, 0.0
    %1115 = vadd.xlane.f32.xlu0 %v1114
    %v1116 = vpop.xlane.xlu0 %1115
    %v1117 = vsel %vm315, %v939, 0.0
    %1118 = vadd.xlane.f32.xlu0 %v1117
    %v1119 = vpop.xlane.xlu0 %1118
    %v1120 = vsel %vm315, %v940, 0.0
    %1121 = vadd.xlane.f32.xlu0 %v1120
    %v1122 = vpop.xlane.xlu0 %1121
    %v1123 = vsel %vm315, %v941, 0.0
    %1124 = vadd.xlane.f32.xlu0 %v1123
    %v1125 = vpop.xlane.xlu0 %1124
    %v1126 = vsel %vm315, %v942, 0.0
    %1127 = vadd.xlane.f32.xlu0 %v1126
    %v1128 = vpop.xlane.xlu0 %1127
    %v1129 = vsel %vm315, %v943, 0.0
    %1130 = vadd.xlane.f32.xlu0 %v1129
    %v1131 = vpop.xlane.xlu0 %1130
    %v1132 = vsel %vm315, %v944, 0.0
    %1133 = vadd.xlane.f32.xlu0 %v1132
    %v1134 = vpop.xlane.xlu0 %1133
    %v1135 = vsel %vm315, %v945, 0.0
    %1136 = vadd.xlane.f32.xlu0 %v1135
    %v1137 = vpop.xlane.xlu0 %1136
    %v1138 = vld [vmem:[#allocation5] sm:$0xff]
    %v1139 = vld [vmem:[#allocation5 + $0x8] sm:$0xff]
    %v1140 = vld [vmem:[#allocation5 + $0x10] sm:$0xff]
    %v1141 = vld [vmem:[#allocation5 + $0x18] sm:$0xff]
    %vm1142 = vcmp.gt.f32.partialorder %v1138, 0.0
    %vm1143 = vcmp.gt.f32.partialorder %v1139, 0.0
    %vm1144 = vcmp.gt.f32.partialorder %v1140, 0.0
    %vm1145 = vcmp.gt.f32.partialorder %v1141, 0.0
    %v1210 = vlaneseq
    %v1211 = vand.u32 %v1210, 127
    %v1212 = vlaneseq
    %v1213 = vshrl.u32 %v1212, 7
    %v1214 = vsub.s32 %v1211, %v1213
    %v1215 = vrot.slane %v948, %v1214
    %v1216 = vadd.s32 %v1211, 4294967288
    %v1217 = vlaneseq
    %v1218 = vshrl.u32 %v1217, 7
    %v1219 = vsub.s32 %v1216, %v1218
    %v1220 = vrot.slane %v951, %v1219
    %vm1221 = vcmask 130112
    %v1222 = vsel %vm1221, %v1220, %v1215
    %v1223 = vlaneseq
    %v1224 = vshrl.u32 %v1223, 7
    %v1225 = vsub.s32 %v1211, %v1224
    %v1226 = vrot.slane %v954, %v1225
    %v1227 = vlaneseq
    %v1228 = vshrl.u32 %v1227, 7
    %v1229 = vsub.s32 %v1216, %v1228
    %v1230 = vrot.slane %v957, %v1229
    %v1231 = vsel %vm1221, %v1230, %v1226
    %v1232 = vlaneseq
    %v1233 = vshrl.u32 %v1232, 7
    %v1234 = vsub.s32 %v1211, %v1233
    %v1235 = vrot.slane %v960, %v1234
    %v1236 = vlaneseq
    %v1237 = vshrl.u32 %v1236, 7
    %v1238 = vsub.s32 %v1216, %v1237
    %v1239 = vrot.slane %v963, %v1238
    %v1240 = vsel %vm1221, %v1239, %v1235
    %v1241 = vlaneseq
    %v1242 = vshrl.u32 %v1241, 7
    %v1243 = vsub.s32 %v1211, %v1242
    %v1244 = vrot.slane %v966, %v1243
    %v1245 = vlaneseq
    %v1246 = vshrl.u32 %v1245, 7
    %v1247 = vsub.s32 %v1216, %v1246
    %v1248 = vrot.slane %v969, %v1247
    %v1249 = vsel %vm1221, %v1248, %v1244
    %v1250 = vlaneseq
    %v1251 = vshrl.u32 %v1250, 7
    %v1252 = vsub.s32 %v1211, %v1251
    %v1253 = vrot.slane %v972, %v1252
    %v1254 = vlaneseq
    %v1255 = vshrl.u32 %v1254, 7
    %v1256 = vsub.s32 %v1216, %v1255
    %v1257 = vrot.slane %v975, %v1256
    %v1258 = vsel %vm1221, %v1257, %v1253
    %v1259 = vlaneseq
    %v1260 = vshrl.u32 %v1259, 7
    %v1261 = vsub.s32 %v1211, %v1260
    %v1262 = vrot.slane %v978, %v1261
    %v1263 = vlaneseq
    %v1264 = vshrl.u32 %v1263, 7
    %v1265 = vsub.s32 %v1216, %v1264
    %v1266 = vrot.slane %v981, %v1265
    %v1267 = vsel %vm1221, %v1266, %v1262
    %v1268 = vlaneseq
    %v1269 = vshrl.u32 %v1268, 7
    %v1270 = vsub.s32 %v1211, %v1269
    %v1271 = vrot.slane %v984, %v1270
    %v1272 = vlaneseq
    %v1273 = vshrl.u32 %v1272, 7
    %v1274 = vsub.s32 %v1216, %v1273
    %v1275 = vrot.slane %v987, %v1274
    %v1276 = vsel %vm1221, %v1275, %v1271
    %v1277 = vlaneseq
    %v1278 = vshrl.u32 %v1277, 7
    %v1279 = vsub.s32 %v1211, %v1278
    %v1280 = vrot.slane %v990, %v1279
    %v1281 = vlaneseq
    %v1282 = vshrl.u32 %v1281, 7
    %v1283 = vsub.s32 %v1216, %v1282
    %v1284 = vrot.slane %v993, %v1283
    %v1285 = vsel %vm1221, %v1284, %v1280
    %v1286 = vlaneseq
    %v1287 = vshrl.u32 %v1286, 7
    %v1288 = vsub.s32 %v1211, %v1287
    %v1289 = vrot.slane %v996, %v1288
    %v1290 = vlaneseq
    %v1291 = vshrl.u32 %v1290, 7
    %v1292 = vsub.s32 %v1216, %v1291
    %v1293 = vrot.slane %v999, %v1292
    %v1294 = vsel %vm1221, %v1293, %v1289
    %v1295 = vlaneseq
    %v1296 = vshrl.u32 %v1295, 7
    %v1297 = vsub.s32 %v1211, %v1296
    %v1298 = vrot.slane %v1002, %v1297
    %v1299 = vlaneseq
    %v1300 = vshrl.u32 %v1299, 7
    %v1301 = vsub.s32 %v1216, %v1300
    %v1302 = vrot.slane %v1005, %v1301
    %v1303 = vsel %vm1221, %v1302, %v1298
    %v1304 = vlaneseq
    %v1305 = vshrl.u32 %v1304, 7
    %v1306 = vsub.s32 %v1211, %v1305
    %v1307 = vrot.slane %v1008, %v1306
    %v1308 = vlaneseq
    %v1309 = vshrl.u32 %v1308, 7
    %v1310 = vsub.s32 %v1216, %v1309
    %v1311 = vrot.slane %v1011, %v1310
    %v1312 = vsel %vm1221, %v1311, %v1307
    %v1313 = vlaneseq
    %v1314 = vshrl.u32 %v1313, 7
    %v1315 = vsub.s32 %v1211, %v1314
    %v1316 = vrot.slane %v1014, %v1315
    %v1317 = vlaneseq
    %v1318 = vshrl.u32 %v1317, 7
    %v1319 = vsub.s32 %v1216, %v1318
    %v1320 = vrot.slane %v1017, %v1319
    %v1321 = vsel %vm1221, %v1320, %v1316
    %v1322 = vlaneseq
    %v1323 = vshrl.u32 %v1322, 7
    %v1324 = vsub.s32 %v1211, %v1323
    %v1325 = vrot.slane %v1020, %v1324
    %v1326 = vlaneseq
    %v1327 = vshrl.u32 %v1326, 7
    %v1328 = vsub.s32 %v1216, %v1327
    %v1329 = vrot.slane %v1023, %v1328
    %v1330 = vsel %vm1221, %v1329, %v1325
    %v1331 = vlaneseq
    %v1332 = vshrl.u32 %v1331, 7
    %v1333 = vsub.s32 %v1211, %v1332
    %v1334 = vrot.slane %v1026, %v1333
    %v1335 = vlaneseq
    %v1336 = vshrl.u32 %v1335, 7
    %v1337 = vsub.s32 %v1216, %v1336
    %v1338 = vrot.slane %v1029, %v1337
    %v1339 = vsel %vm1221, %v1338, %v1334
    %v1340 = vlaneseq
    %v1341 = vshrl.u32 %v1340, 7
    %v1342 = vsub.s32 %v1211, %v1341
    %v1343 = vrot.slane %v1032, %v1342
    %v1344 = vlaneseq
    %v1345 = vshrl.u32 %v1344, 7
    %v1346 = vsub.s32 %v1216, %v1345
    %v1347 = vrot.slane %v1035, %v1346
    %v1348 = vsel %vm1221, %v1347, %v1343
    %v1349 = vlaneseq
    %v1350 = vshrl.u32 %v1349, 7
    %v1351 = vsub.s32 %v1211, %v1350
    %v1352 = vrot.slane %v1038, %v1351
    %v1353 = vlaneseq
    %v1354 = vshrl.u32 %v1353, 7
    %v1355 = vsub.s32 %v1216, %v1354
    %v1356 = vrot.slane %v1041, %v1355
    %v1357 = vsel %vm1221, %v1356, %v1352
    %v1358 = vlaneseq
    %v1359 = vshrl.u32 %v1358, 7
    %v1360 = vsub.s32 %v1211, %v1359
    %v1361 = vrot.slane %v1044, %v1360
    %v1362 = vlaneseq
    %v1363 = vshrl.u32 %v1362, 7
    %v1364 = vsub.s32 %v1216, %v1363
    %v1365 = vrot.slane %v1047, %v1364
    %v1366 = vsel %vm1221, %v1365, %v1361
    %v1367 = vlaneseq
    %v1368 = vshrl.u32 %v1367, 7
    %v1369 = vsub.s32 %v1211, %v1368
    %v1370 = vrot.slane %v1050, %v1369
    %v1371 = vlaneseq
    %v1372 = vshrl.u32 %v1371, 7
    %v1373 = vsub.s32 %v1216, %v1372
    %v1374 = vrot.slane %v1053, %v1373
    %v1375 = vsel %vm1221, %v1374, %v1370
    %v1376 = vlaneseq
    %v1377 = vshrl.u32 %v1376, 7
    %v1378 = vsub.s32 %v1211, %v1377
    %v1379 = vrot.slane %v1056, %v1378
    %v1380 = vlaneseq
    %v1381 = vshrl.u32 %v1380, 7
    %v1382 = vsub.s32 %v1216, %v1381
    %v1383 = vrot.slane %v1059, %v1382
    %v1384 = vsel %vm1221, %v1383, %v1379
    %v1385 = vlaneseq
    %v1386 = vshrl.u32 %v1385, 7
    %v1387 = vsub.s32 %v1211, %v1386
    %v1388 = vrot.slane %v1062, %v1387
    %v1389 = vlaneseq
    %v1390 = vshrl.u32 %v1389, 7
    %v1391 = vsub.s32 %v1216, %v1390
    %v1392 = vrot.slane %v1065, %v1391
    %v1393 = vsel %vm1221, %v1392, %v1388
    %v1394 = vlaneseq
    %v1395 = vshrl.u32 %v1394, 7
    %v1396 = vsub.s32 %v1211, %v1395
    %v1397 = vrot.slane %v1068, %v1396
    %v1398 = vlaneseq
    %v1399 = vshrl.u32 %v1398, 7
    %v1400 = vsub.s32 %v1216, %v1399
    %v1401 = vrot.slane %v1071, %v1400
    %v1402 = vsel %vm1221, %v1401, %v1397
    %v1403 = vlaneseq
    %v1404 = vshrl.u32 %v1403, 7
    %v1405 = vsub.s32 %v1211, %v1404
    %v1406 = vrot.slane %v1074, %v1405
    %v1407 = vlaneseq
    %v1408 = vshrl.u32 %v1407, 7
    %v1409 = vsub.s32 %v1216, %v1408
    %v1410 = vrot.slane %v1077, %v1409
    %v1411 = vsel %vm1221, %v1410, %v1406
    %v1412 = vlaneseq
    %v1413 = vshrl.u32 %v1412, 7
    %v1414 = vsub.s32 %v1211, %v1413
    %v1415 = vrot.slane %v1080, %v1414
    %v1416 = vlaneseq
    %v1417 = vshrl.u32 %v1416, 7
    %v1418 = vsub.s32 %v1216, %v1417
    %v1419 = vrot.slane %v1083, %v1418
    %v1420 = vsel %vm1221, %v1419, %v1415
    %v1421 = vlaneseq
    %v1422 = vshrl.u32 %v1421, 7
    %v1423 = vsub.s32 %v1211, %v1422
    %v1424 = vrot.slane %v1086, %v1423
    %v1425 = vlaneseq
    %v1426 = vshrl.u32 %v1425, 7
    %v1427 = vsub.s32 %v1216, %v1426
    %v1428 = vrot.slane %v1089, %v1427
    %v1429 = vsel %vm1221, %v1428, %v1424
    %v1430 = vlaneseq
    %v1431 = vshrl.u32 %v1430, 7
    %v1432 = vsub.s32 %v1211, %v1431
    %v1433 = vrot.slane %v1092, %v1432
    %v1434 = vlaneseq
    %v1435 = vshrl.u32 %v1434, 7
    %v1436 = vsub.s32 %v1216, %v1435
    %v1437 = vrot.slane %v1095, %v1436
    %v1438 = vsel %vm1221, %v1437, %v1433
    %v1439 = vlaneseq
    %v1440 = vshrl.u32 %v1439, 7
    %v1441 = vsub.s32 %v1211, %v1440
    %v1442 = vrot.slane %v1098, %v1441
    %v1443 = vlaneseq
    %v1444 = vshrl.u32 %v1443, 7
    %v1445 = vsub.s32 %v1216, %v1444
    %v1446 = vrot.slane %v1101, %v1445
    %v1447 = vsel %vm1221, %v1446, %v1442
    %v1448 = vlaneseq
    %v1449 = vshrl.u32 %v1448, 7
    %v1450 = vsub.s32 %v1211, %v1449
    %v1451 = vrot.slane %v1104, %v1450
    %v1452 = vlaneseq
    %v1453 = vshrl.u32 %v1452, 7
    %v1454 = vsub.s32 %v1216, %v1453
    %v1455 = vrot.slane %v1107, %v1454
    %v1456 = vsel %vm1221, %v1455, %v1451
    %v1457 = vlaneseq
    %v1458 = vshrl.u32 %v1457, 7
    %v1459 = vsub.s32 %v1211, %v1458
    %v1460 = vrot.slane %v1110, %v1459
    %v1461 = vlaneseq
    %v1462 = vshrl.u32 %v1461, 7
    %v1463 = vsub.s32 %v1216, %v1462
    %v1464 = vrot.slane %v1113, %v1463
    %v1465 = vsel %vm1221, %v1464, %v1460
    %v1466 = vlaneseq
    %v1467 = vshrl.u32 %v1466, 7
    %v1468 = vsub.s32 %v1211, %v1467
    %v1469 = vrot.slane %v1116, %v1468
    %v1470 = vlaneseq
    %v1471 = vshrl.u32 %v1470, 7
    %v1472 = vsub.s32 %v1216, %v1471
    %v1473 = vrot.slane %v1119, %v1472
    %v1474 = vsel %vm1221, %v1473, %v1469
    %v1475 = vlaneseq
    %v1476 = vshrl.u32 %v1475, 7
    %v1477 = vsub.s32 %v1211, %v1476
    %v1478 = vrot.slane %v1122, %v1477
    %v1479 = vlaneseq
    %v1480 = vshrl.u32 %v1479, 7
    %v1481 = vsub.s32 %v1216, %v1480
    %v1482 = vrot.slane %v1125, %v1481
    %v1483 = vsel %vm1221, %v1482, %v1478
    %v1484 = vlaneseq
    %v1485 = vshrl.u32 %v1484, 7
    %v1486 = vsub.s32 %v1211, %v1485
    %v1487 = vrot.slane %v1128, %v1486
    %v1488 = vlaneseq
    %v1489 = vshrl.u32 %v1488, 7
    %v1490 = vsub.s32 %v1216, %v1489
    %v1491 = vrot.slane %v1131, %v1490
    %v1492 = vsel %vm1221, %v1491, %v1487
    %v1493 = vlaneseq
    %v1494 = vshrl.u32 %v1493, 7
    %v1495 = vsub.s32 %v1211, %v1494
    %v1496 = vrot.slane %v1134, %v1495
    %v1497 = vlaneseq
    %v1498 = vshrl.u32 %v1497, 7
    %v1499 = vsub.s32 %v1216, %v1498
    %v1500 = vrot.slane %v1137, %v1499
    %v1501 = vsel %vm1221, %v1500, %v1496
    %vm1502 = vcmask 1041409
    %v1503 = vsel %vm1502, %v1231, %v1222
    %vm1504 = vcmask 1042434
    %v1505 = vsel %vm1504, %v1240, %v1503
    %vm1506 = vcmask 1043459
    %v1507 = vsel %vm1506, %v1249, %v1505
    %vm1508 = vcmask 1044484
    %v1509 = vsel %vm1508, %v1258, %v1507
    %vm1510 = vcmask 1045509
    %v1511 = vsel %vm1510, %v1267, %v1509
    %vm1512 = vcmask 1046534
    %v1513 = vsel %vm1512, %v1276, %v1511
    %vm1514 = vcmask 1047559
    %v1515 = vsel %vm1514, %v1285, %v1513
    %v1516 = vsel %vm1502, %v1303, %v1294
    %v1517 = vsel %vm1504, %v1312, %v1516
    %v1518 = vsel %vm1506, %v1321, %v1517
    %v1519 = vsel %vm1508, %v1330, %v1518
    %v1520 = vsel %vm1510, %v1339, %v1519
    %v1521 = vsel %vm1512, %v1348, %v1520
    %v1522 = vsel %vm1514, %v1357, %v1521
    %v1523 = vsel %vm1502, %v1375, %v1366
    %v1524 = vsel %vm1504, %v1384, %v1523
    %v1525 = vsel %vm1506, %v1393, %v1524
    %v1526 = vsel %vm1508, %v1402, %v1525
    %v1527 = vsel %vm1510, %v1411, %v1526
    %v1528 = vsel %vm1512, %v1420, %v1527
    %v1529 = vsel %vm1514, %v1429, %v1528
    %v1530 = vsel %vm1502, %v1447, %v1438
    %v1531 = vsel %vm1504, %v1456, %v1530
    %v1532 = vsel %vm1506, %v1465, %v1531
    %v1533 = vsel %vm1508, %v1474, %v1532
    %v1534 = vsel %vm1510, %v1483, %v1533
    %v1535 = vsel %vm1512, %v1492, %v1534
    %v1536 = vsel %vm1514, %v1501, %v1535
    %v1541 = vsel %vm1142, %v1515, -1e+30
    %v1542 = vsel %vm1143, %v1522, -1e+30
    %v1543 = vsel %vm1144, %v1529, -1e+30
    %v1544 = vsel %vm1145, %v1536, -1e+30
    %vm1545 = vcmask 130048
    %v1546 = vsel %vm1545, %v1541, -inf
    %1547 = vmax.xlane.f32.xlu0 %v1546
    %v1548 = vpop.xlane.xlu0 %1547
    %v1549 = vsel %vm1545, %v1542, -inf
    %1550 = vmax.xlane.f32.xlu0 %v1549
    %v1551 = vpop.xlane.xlu0 %1550
    %v1552 = vsel %vm1545, %v1543, -inf
    %1553 = vmax.xlane.f32.xlu0 %v1552
    %v1554 = vpop.xlane.xlu0 %1553
    %v1555 = vsel %vm1545, %v1544, -inf
    %1556 = vmax.xlane.f32.xlu0 %v1555
    %v1557 = vpop.xlane.xlu0 %1556
    %v1558 = vsub.f32 %v1541, %v1548
    %v1559 = vsub.f32 %v1542, %v1551
    %v1560 = vsub.f32 %v1543, %v1554
    %v1561 = vsub.f32 %v1544, %v1557
    %v1562 = vmul.f32 %v1558, 1.442695
    %v1563 = vpow.pop %v1562
    %v1564 = vmul.f32 %v1559, 1.442695
    %v1565 = vpow.pop %v1564
    %v1566 = vmul.f32 %v1560, 1.442695
    %v1567 = vpow.pop %v1566
    %v1568 = vmul.f32 %v1561, 1.442695
    %v1569 = vpow.pop %v1568
    %v1570 = vmul.f32 %v1563, %v1138
    %v1571 = vmul.f32 %v1565, %v1139
    %v1572 = vmul.f32 %v1567, %v1140
    %v1573 = vmul.f32 %v1569, %v1141
    %v1574 = vsel %vm1545, %v1570, 0.0
    %1575 = vadd.xlane.f32.xlu0 %v1574
    %v1576 = vpop.xlane.xlu0 %1575
    %v1577 = vsel %vm1545, %v1571, 0.0
    %1578 = vadd.xlane.f32.xlu0 %v1577
    %v1579 = vpop.xlane.xlu0 %1578
    %v1580 = vsel %vm1545, %v1572, 0.0
    %1581 = vadd.xlane.f32.xlu0 %v1580
    %v1582 = vpop.xlane.xlu0 %1581
    %v1583 = vsel %vm1545, %v1573, 0.0
    %1584 = vadd.xlane.f32.xlu0 %v1583
    %v1585 = vpop.xlane.xlu0 %1584
    %v1586 = vmax.f32 %v1576, 1e-30
    %v1587 = vmax.f32 %v1579, 1e-30
    %v1588 = vmax.f32 %v1582, 1e-30
    %v1589 = vmax.f32 %v1585, 1e-30
    %v1590 = vrcp.pop %v1586
    %v1591 = vmul.f32 %v1570, %v1590
    %v1592 = vrcp.pop %v1587
    %v1593 = vmul.f32 %v1571, %v1592
    %v1594 = vrcp.pop %v1588
    %v1595 = vmul.f32 %v1572, %v1594
    %v1596 = vrcp.pop %v1589
    %v1597 = vmul.f32 %v1573, %v1596
    %v1598 = vlaneseq
    %v1599 = vshrl.u32 %v1598, 7
    %v1600 = vsub.s32 0, %v1599
    %v1601 = vrot.slane %v1591, %v1600
    %1603 = vbcast.lane.b32.xlu0 %v1601, 256
    %v1604 = vpop.permute.xlu0 %1603
    %s1606 = sor.u32 256, 8
    %1607 = vbcast.lane.b32.xlu0 %v1601, %s1606
    %v1608 = vpop.permute.xlu0 %1607
    %v1609 = vlaneseq
    %v1610 = vshrl.u32 %v1609, 7
    %v1611 = vsub.s32 1, %v1610
    %v1612 = vrot.slane %v1591, %v1611
    %1614 = vbcast.lane.b32.xlu0 %v1612, 256
    %v1615 = vpop.permute.xlu0 %1614
    %s1617 = sor.u32 256, 8
    %1618 = vbcast.lane.b32.xlu0 %v1612, %s1617
    %v1619 = vpop.permute.xlu0 %1618
    %v1620 = vlaneseq
    %v1621 = vshrl.u32 %v1620, 7
    %v1622 = vsub.s32 2, %v1621
    %v1623 = vrot.slane %v1591, %v1622
    %1625 = vbcast.lane.b32.xlu0 %v1623, 256
    %v1626 = vpop.permute.xlu0 %1625
    %s1628 = sor.u32 256, 8
    %1629 = vbcast.lane.b32.xlu0 %v1623, %s1628
    %v1630 = vpop.permute.xlu0 %1629
    %v1631 = vlaneseq
    %v1632 = vshrl.u32 %v1631, 7
    %v1633 = vsub.s32 3, %v1632
    %v1634 = vrot.slane %v1591, %v1633
    %1636 = vbcast.lane.b32.xlu0 %v1634, 256
    %v1637 = vpop.permute.xlu0 %1636
    %s1639 = sor.u32 256, 8
    %1640 = vbcast.lane.b32.xlu0 %v1634, %s1639
    %v1641 = vpop.permute.xlu0 %1640
    %v1642 = vlaneseq
    %v1643 = vshrl.u32 %v1642, 7
    %v1644 = vsub.s32 4, %v1643
    %v1645 = vrot.slane %v1591, %v1644
    %1647 = vbcast.lane.b32.xlu0 %v1645, 256
    %v1648 = vpop.permute.xlu0 %1647
    %s1650 = sor.u32 256, 8
    %1651 = vbcast.lane.b32.xlu0 %v1645, %s1650
    %v1652 = vpop.permute.xlu0 %1651
    %v1653 = vlaneseq
    %v1654 = vshrl.u32 %v1653, 7
    %v1655 = vsub.s32 5, %v1654
    %v1656 = vrot.slane %v1591, %v1655
    %1658 = vbcast.lane.b32.xlu0 %v1656, 256
    %v1659 = vpop.permute.xlu0 %1658
    %s1661 = sor.u32 256, 8
    %1662 = vbcast.lane.b32.xlu0 %v1656, %s1661
    %v1663 = vpop.permute.xlu0 %1662
    %v1664 = vlaneseq
    %v1665 = vshrl.u32 %v1664, 7
    %v1666 = vsub.s32 6, %v1665
    %v1667 = vrot.slane %v1591, %v1666
    %1669 = vbcast.lane.b32.xlu0 %v1667, 256
    %v1670 = vpop.permute.xlu0 %1669
    %s1672 = sor.u32 256, 8
    %1673 = vbcast.lane.b32.xlu0 %v1667, %s1672
    %v1674 = vpop.permute.xlu0 %1673
    %v1675 = vlaneseq
    %v1676 = vshrl.u32 %v1675, 7
    %v1677 = vsub.s32 7, %v1676
    %v1678 = vrot.slane %v1591, %v1677
    %1680 = vbcast.lane.b32.xlu0 %v1678, 256
    %v1681 = vpop.permute.xlu0 %1680
    %s1683 = sor.u32 256, 8
    %1684 = vbcast.lane.b32.xlu0 %v1678, %s1683
    %v1685 = vpop.permute.xlu0 %1684
    %v1686 = vlaneseq
    %v1687 = vshrl.u32 %v1686, 7
    %v1688 = vsub.s32 0, %v1687
    %v1689 = vrot.slane %v1593, %v1688
    %1691 = vbcast.lane.b32.xlu0 %v1689, 256
    %v1692 = vpop.permute.xlu0 %1691
    %s1694 = sor.u32 256, 8
    %1695 = vbcast.lane.b32.xlu0 %v1689, %s1694
    %v1696 = vpop.permute.xlu0 %1695
    %v1697 = vlaneseq
    %v1698 = vshrl.u32 %v1697, 7
    %v1699 = vsub.s32 1, %v1698
    %v1700 = vrot.slane %v1593, %v1699
    %1702 = vbcast.lane.b32.xlu0 %v1700, 256
    %v1703 = vpop.permute.xlu0 %1702
    %s1705 = sor.u32 256, 8
    %1706 = vbcast.lane.b32.xlu0 %v1700, %s1705
    %v1707 = vpop.permute.xlu0 %1706
    %v1708 = vlaneseq
    %v1709 = vshrl.u32 %v1708, 7
    %v1710 = vsub.s32 2, %v1709
    %v1711 = vrot.slane %v1593, %v1710
    %1713 = vbcast.lane.b32.xlu0 %v1711, 256
    %v1714 = vpop.permute.xlu0 %1713
    %s1716 = sor.u32 256, 8
    %1717 = vbcast.lane.b32.xlu0 %v1711, %s1716
    %v1718 = vpop.permute.xlu0 %1717
    %v1719 = vlaneseq
    %v1720 = vshrl.u32 %v1719, 7
    %v1721 = vsub.s32 3, %v1720
    %v1722 = vrot.slane %v1593, %v1721
    %1724 = vbcast.lane.b32.xlu0 %v1722, 256
    %v1725 = vpop.permute.xlu0 %1724
    %s1727 = sor.u32 256, 8
    %1728 = vbcast.lane.b32.xlu0 %v1722, %s1727
    %v1729 = vpop.permute.xlu0 %1728
    %v1730 = vlaneseq
    %v1731 = vshrl.u32 %v1730, 7
    %v1732 = vsub.s32 4, %v1731
    %v1733 = vrot.slane %v1593, %v1732
    %1735 = vbcast.lane.b32.xlu0 %v1733, 256
    %v1736 = vpop.permute.xlu0 %1735
    %s1738 = sor.u32 256, 8
    %1739 = vbcast.lane.b32.xlu0 %v1733, %s1738
    %v1740 = vpop.permute.xlu0 %1739
    %v1741 = vlaneseq
    %v1742 = vshrl.u32 %v1741, 7
    %v1743 = vsub.s32 5, %v1742
    %v1744 = vrot.slane %v1593, %v1743
    %1746 = vbcast.lane.b32.xlu0 %v1744, 256
    %v1747 = vpop.permute.xlu0 %1746
    %s1749 = sor.u32 256, 8
    %1750 = vbcast.lane.b32.xlu0 %v1744, %s1749
    %v1751 = vpop.permute.xlu0 %1750
    %v1752 = vlaneseq
    %v1753 = vshrl.u32 %v1752, 7
    %v1754 = vsub.s32 6, %v1753
    %v1755 = vrot.slane %v1593, %v1754
    %1757 = vbcast.lane.b32.xlu0 %v1755, 256
    %v1758 = vpop.permute.xlu0 %1757
    %s1760 = sor.u32 256, 8
    %1761 = vbcast.lane.b32.xlu0 %v1755, %s1760
    %v1762 = vpop.permute.xlu0 %1761
    %v1763 = vlaneseq
    %v1764 = vshrl.u32 %v1763, 7
    %v1765 = vsub.s32 7, %v1764
    %v1766 = vrot.slane %v1593, %v1765
    %1768 = vbcast.lane.b32.xlu0 %v1766, 256
    %v1769 = vpop.permute.xlu0 %1768
    %s1771 = sor.u32 256, 8
    %1772 = vbcast.lane.b32.xlu0 %v1766, %s1771
    %v1773 = vpop.permute.xlu0 %1772
    %v1774 = vlaneseq
    %v1775 = vshrl.u32 %v1774, 7
    %v1776 = vsub.s32 0, %v1775
    %v1777 = vrot.slane %v1595, %v1776
    %1779 = vbcast.lane.b32.xlu0 %v1777, 256
    %v1780 = vpop.permute.xlu0 %1779
    %s1782 = sor.u32 256, 8
    %1783 = vbcast.lane.b32.xlu0 %v1777, %s1782
    %v1784 = vpop.permute.xlu0 %1783
    %v1785 = vlaneseq
    %v1786 = vshrl.u32 %v1785, 7
    %v1787 = vsub.s32 1, %v1786
    %v1788 = vrot.slane %v1595, %v1787
    %1790 = vbcast.lane.b32.xlu0 %v1788, 256
    %v1791 = vpop.permute.xlu0 %1790
    %s1793 = sor.u32 256, 8
    %1794 = vbcast.lane.b32.xlu0 %v1788, %s1793
    %v1795 = vpop.permute.xlu0 %1794
    %v1796 = vlaneseq
    %v1797 = vshrl.u32 %v1796, 7
    %v1798 = vsub.s32 2, %v1797
    %v1799 = vrot.slane %v1595, %v1798
    %1801 = vbcast.lane.b32.xlu0 %v1799, 256
    %v1802 = vpop.permute.xlu0 %1801
    %s1804 = sor.u32 256, 8
    %1805 = vbcast.lane.b32.xlu0 %v1799, %s1804
    %v1806 = vpop.permute.xlu0 %1805
    %v1807 = vlaneseq
    %v1808 = vshrl.u32 %v1807, 7
    %v1809 = vsub.s32 3, %v1808
    %v1810 = vrot.slane %v1595, %v1809
    %1812 = vbcast.lane.b32.xlu0 %v1810, 256
    %v1813 = vpop.permute.xlu0 %1812
    %s1815 = sor.u32 256, 8
    %1816 = vbcast.lane.b32.xlu0 %v1810, %s1815
    %v1817 = vpop.permute.xlu0 %1816
    %v1818 = vlaneseq
    %v1819 = vshrl.u32 %v1818, 7
    %v1820 = vsub.s32 4, %v1819
    %v1821 = vrot.slane %v1595, %v1820
    %1823 = vbcast.lane.b32.xlu0 %v1821, 256
    %v1824 = vpop.permute.xlu0 %1823
    %s1826 = sor.u32 256, 8
    %1827 = vbcast.lane.b32.xlu0 %v1821, %s1826
    %v1828 = vpop.permute.xlu0 %1827
    %v1829 = vlaneseq
    %v1830 = vshrl.u32 %v1829, 7
    %v1831 = vsub.s32 5, %v1830
    %v1832 = vrot.slane %v1595, %v1831
    %1834 = vbcast.lane.b32.xlu0 %v1832, 256
    %v1835 = vpop.permute.xlu0 %1834
    %s1837 = sor.u32 256, 8
    %1838 = vbcast.lane.b32.xlu0 %v1832, %s1837
    %v1839 = vpop.permute.xlu0 %1838
    %v1840 = vlaneseq
    %v1841 = vshrl.u32 %v1840, 7
    %v1842 = vsub.s32 6, %v1841
    %v1843 = vrot.slane %v1595, %v1842
    %1845 = vbcast.lane.b32.xlu0 %v1843, 256
    %v1846 = vpop.permute.xlu0 %1845
    %s1848 = sor.u32 256, 8
    %1849 = vbcast.lane.b32.xlu0 %v1843, %s1848
    %v1850 = vpop.permute.xlu0 %1849
    %v1851 = vlaneseq
    %v1852 = vshrl.u32 %v1851, 7
    %v1853 = vsub.s32 7, %v1852
    %v1854 = vrot.slane %v1595, %v1853
    %1856 = vbcast.lane.b32.xlu0 %v1854, 256
    %v1857 = vpop.permute.xlu0 %1856
    %s1859 = sor.u32 256, 8
    %1860 = vbcast.lane.b32.xlu0 %v1854, %s1859
    %v1861 = vpop.permute.xlu0 %1860
    %v1862 = vlaneseq
    %v1863 = vshrl.u32 %v1862, 7
    %v1864 = vsub.s32 0, %v1863
    %v1865 = vrot.slane %v1597, %v1864
    %1867 = vbcast.lane.b32.xlu0 %v1865, 256
    %v1868 = vpop.permute.xlu0 %1867
    %s1870 = sor.u32 256, 8
    %1871 = vbcast.lane.b32.xlu0 %v1865, %s1870
    %v1872 = vpop.permute.xlu0 %1871
    %v1873 = vlaneseq
    %v1874 = vshrl.u32 %v1873, 7
    %v1875 = vsub.s32 1, %v1874
    %v1876 = vrot.slane %v1597, %v1875
    %1878 = vbcast.lane.b32.xlu0 %v1876, 256
    %v1879 = vpop.permute.xlu0 %1878
    %s1881 = sor.u32 256, 8
    %1882 = vbcast.lane.b32.xlu0 %v1876, %s1881
    %v1883 = vpop.permute.xlu0 %1882
    %v1884 = vlaneseq
    %v1885 = vshrl.u32 %v1884, 7
    %v1886 = vsub.s32 2, %v1885
    %v1887 = vrot.slane %v1597, %v1886
    %1889 = vbcast.lane.b32.xlu0 %v1887, 256
    %v1890 = vpop.permute.xlu0 %1889
    %s1892 = sor.u32 256, 8
    %1893 = vbcast.lane.b32.xlu0 %v1887, %s1892
    %v1894 = vpop.permute.xlu0 %1893
    %v1895 = vlaneseq
    %v1896 = vshrl.u32 %v1895, 7
    %v1897 = vsub.s32 3, %v1896
    %v1898 = vrot.slane %v1597, %v1897
    %1900 = vbcast.lane.b32.xlu0 %v1898, 256
    %v1901 = vpop.permute.xlu0 %1900
    %s1903 = sor.u32 256, 8
    %1904 = vbcast.lane.b32.xlu0 %v1898, %s1903
    %v1905 = vpop.permute.xlu0 %1904
    %v1906 = vlaneseq
    %v1907 = vshrl.u32 %v1906, 7
    %v1908 = vsub.s32 4, %v1907
    %v1909 = vrot.slane %v1597, %v1908
    %1911 = vbcast.lane.b32.xlu0 %v1909, 256
    %v1912 = vpop.permute.xlu0 %1911
    %s1914 = sor.u32 256, 8
    %1915 = vbcast.lane.b32.xlu0 %v1909, %s1914
    %v1916 = vpop.permute.xlu0 %1915
    %v1917 = vlaneseq
    %v1918 = vshrl.u32 %v1917, 7
    %v1919 = vsub.s32 5, %v1918
    %v1920 = vrot.slane %v1597, %v1919
    %1922 = vbcast.lane.b32.xlu0 %v1920, 256
    %v1923 = vpop.permute.xlu0 %1922
    %s1925 = sor.u32 256, 8
    %1926 = vbcast.lane.b32.xlu0 %v1920, %s1925
    %v1927 = vpop.permute.xlu0 %1926
    %v1928 = vlaneseq
    %v1929 = vshrl.u32 %v1928, 7
    %v1930 = vsub.s32 6, %v1929
    %v1931 = vrot.slane %v1597, %v1930
    %1933 = vbcast.lane.b32.xlu0 %v1931, 256
    %v1934 = vpop.permute.xlu0 %1933
    %s1936 = sor.u32 256, 8
    %1937 = vbcast.lane.b32.xlu0 %v1931, %s1936
    %v1938 = vpop.permute.xlu0 %1937
    %v1939 = vlaneseq
    %v1940 = vshrl.u32 %v1939, 7
    %v1941 = vsub.s32 7, %v1940
    %v1942 = vrot.slane %v1597, %v1941
    %1944 = vbcast.lane.b32.xlu0 %v1942, 256
    %v1945 = vpop.permute.xlu0 %1944
    %s1947 = sor.u32 256, 8
    %1948 = vbcast.lane.b32.xlu0 %v1942, %s1947
    %v1949 = vpop.permute.xlu0 %1948
    %v1950 = vunpack.c.l.bf16 %v75
    %v1951 = vunpack.c.l.bf16 %v76
    %v1952 = vunpack.c.l.bf16 %v77
    %v1953 = vunpack.c.l.bf16 %v78
    %v1954 = vunpack.c.l.bf16 %v79
    %v1955 = vunpack.c.l.bf16 %v80
    %v1956 = vunpack.c.l.bf16 %v81
    %v1957 = vunpack.c.l.bf16 %v82
    %v1958 = vunpack.c.l.bf16 %v83
    %v1959 = vunpack.c.l.bf16 %v84
    %v1960 = vunpack.c.l.bf16 %v85
    %v1961 = vunpack.c.l.bf16 %v86
    %v1962 = vunpack.c.l.bf16 %v87
    %v1963 = vunpack.c.l.bf16 %v88
    %v1964 = vunpack.c.l.bf16 %v89
    %v1965 = vunpack.c.l.bf16 %v90
    %v1966 = vunpack.c.l.bf16 %v91
    %v1967 = vunpack.c.l.bf16 %v92
    %v1968 = vunpack.c.l.bf16 %v93
    %v1969 = vunpack.c.l.bf16 %v94
    %v1970 = vunpack.c.l.bf16 %v95
    %v1971 = vunpack.c.l.bf16 %v96
    %v1972 = vunpack.c.l.bf16 %v97
    %v1973 = vunpack.c.l.bf16 %v98
    %v1974 = vunpack.c.l.bf16 %v99
    %v1975 = vunpack.c.l.bf16 %v100
    %v1976 = vunpack.c.l.bf16 %v101
    %v1977 = vunpack.c.l.bf16 %v102
    %v1978 = vunpack.c.l.bf16 %v103
    %v1979 = vunpack.c.l.bf16 %v104
    %v1980 = vunpack.c.l.bf16 %v105
    %v1981 = vunpack.c.l.bf16 %v106
    %v1982 = vunpack.c.l.bf16 %v107
    %v1983 = vunpack.c.l.bf16 %v108
    %v1984 = vunpack.c.l.bf16 %v109
    %v1985 = vunpack.c.l.bf16 %v110
    %v1986 = vunpack.c.l.bf16 %v111
    %v1987 = vunpack.c.l.bf16 %v112
    %v1988 = vunpack.c.l.bf16 %v113
    %v1989 = vunpack.c.l.bf16 %v114
    %v1990 = vunpack.c.l.bf16 %v115
    %v1991 = vunpack.c.l.bf16 %v116
    %v1992 = vunpack.c.l.bf16 %v117
    %v1993 = vunpack.c.l.bf16 %v118
    %v1994 = vunpack.c.l.bf16 %v119
    %v1995 = vunpack.c.l.bf16 %v120
    %v1996 = vunpack.c.l.bf16 %v121
    %v1997 = vunpack.c.l.bf16 %v122
    %v1998 = vunpack.c.l.bf16 %v123
    %v1999 = vunpack.c.l.bf16 %v124
    %v2000 = vunpack.c.l.bf16 %v125
    %v2001 = vunpack.c.l.bf16 %v126
    %v2002 = vunpack.c.l.bf16 %v127
    %v2003 = vunpack.c.l.bf16 %v128
    %v2004 = vunpack.c.l.bf16 %v129
    %v2005 = vunpack.c.l.bf16 %v130
    %v2006 = vunpack.c.l.bf16 %v131
    %v2007 = vunpack.c.l.bf16 %v132
    %v2008 = vunpack.c.l.bf16 %v133
    %v2009 = vunpack.c.l.bf16 %v134
    %v2010 = vunpack.c.l.bf16 %v135
    %v2011 = vunpack.c.l.bf16 %v136
    %v2012 = vunpack.c.l.bf16 %v137
    %v2013 = vunpack.c.l.bf16 %v138
    %v2014 = vmul.f32 %v1604, %v1950
    %v2015 = vmul.f32 %v1608, %v1951
    %v2016 = vmul.f32 %v1615, %v1952
    %v2017 = vmul.f32 %v1619, %v1953
    %v2018 = vmul.f32 %v1626, %v1954
    %v2019 = vmul.f32 %v1630, %v1955
    %v2020 = vmul.f32 %v1637, %v1956
    %v2021 = vmul.f32 %v1641, %v1957
    %v2022 = vmul.f32 %v1648, %v1958
    %v2023 = vmul.f32 %v1652, %v1959
    %v2024 = vmul.f32 %v1659, %v1960
    %v2025 = vmul.f32 %v1663, %v1961
    %v2026 = vmul.f32 %v1670, %v1962
    %v2027 = vmul.f32 %v1674, %v1963
    %v2028 = vmul.f32 %v1681, %v1964
    %v2029 = vmul.f32 %v1685, %v1965
    %v2030 = vmul.f32 %v1692, %v1966
    %v2031 = vmul.f32 %v1696, %v1967
    %v2032 = vmul.f32 %v1703, %v1968
    %v2033 = vmul.f32 %v1707, %v1969
    %v2034 = vmul.f32 %v1714, %v1970
    %v2035 = vmul.f32 %v1718, %v1971
    %v2036 = vmul.f32 %v1725, %v1972
    %v2037 = vmul.f32 %v1729, %v1973
    %v2038 = vmul.f32 %v1736, %v1974
    %v2039 = vmul.f32 %v1740, %v1975
    %v2040 = vmul.f32 %v1747, %v1976
    %v2041 = vmul.f32 %v1751, %v1977
    %v2042 = vmul.f32 %v1758, %v1978
    %v2043 = vmul.f32 %v1762, %v1979
    %v2044 = vmul.f32 %v1769, %v1980
    %v2045 = vmul.f32 %v1773, %v1981
    %v2046 = vmul.f32 %v1780, %v1982
    %v2047 = vmul.f32 %v1784, %v1983
    %v2048 = vmul.f32 %v1791, %v1984
    %v2049 = vmul.f32 %v1795, %v1985
    %v2050 = vmul.f32 %v1802, %v1986
    %v2051 = vmul.f32 %v1806, %v1987
    %v2052 = vmul.f32 %v1813, %v1988
    %v2053 = vmul.f32 %v1817, %v1989
    %v2054 = vmul.f32 %v1824, %v1990
    %v2055 = vmul.f32 %v1828, %v1991
    %v2056 = vmul.f32 %v1835, %v1992
    %v2057 = vmul.f32 %v1839, %v1993
    %v2058 = vmul.f32 %v1846, %v1994
    %v2059 = vmul.f32 %v1850, %v1995
    %v2060 = vmul.f32 %v1857, %v1996
    %v2061 = vmul.f32 %v1861, %v1997
    %v2062 = vmul.f32 %v1868, %v1998
    %v2063 = vmul.f32 %v1872, %v1999
    %v2064 = vmul.f32 %v1879, %v2000
    %v2065 = vmul.f32 %v1883, %v2001
    %v2066 = vmul.f32 %v1890, %v2002
    %v2067 = vmul.f32 %v1894, %v2003
    %v2068 = vmul.f32 %v1901, %v2004
    %v2069 = vmul.f32 %v1905, %v2005
    %v2070 = vmul.f32 %v1912, %v2006
    %v2071 = vmul.f32 %v1916, %v2007
    %v2072 = vmul.f32 %v1923, %v2008
    %v2073 = vmul.f32 %v1927, %v2009
    %v2074 = vmul.f32 %v1934, %v2010
    %v2075 = vmul.f32 %v1938, %v2011
    %v2076 = vmul.f32 %v1945, %v2012
    %v2077 = vmul.f32 %v1949, %v2013
    %v2078 = vsel %vm315, %v2014, 0.0
    %v2079 = vsel %vm315, %v2015, 0.0
    %v2080 = vadd.f32 %v2078, %v2079
    %v2081 = vrot.slane %v2080, 4
    %v2082 = vadd.f32 %v2080, %v2081
    %v2083 = vrot.slane %v2082, 2
    %v2084 = vadd.f32 %v2082, %v2083
    %v2085 = vrot.slane %v2084, 1
    %v2086 = vadd.f32 %v2084, %v2085
    %v2087 = vsel %vm315, %v2016, 0.0
    %v2088 = vsel %vm315, %v2017, 0.0
    %v2089 = vadd.f32 %v2087, %v2088
    %v2090 = vrot.slane %v2089, 4
    %v2091 = vadd.f32 %v2089, %v2090
    %v2092 = vrot.slane %v2091, 2
    %v2093 = vadd.f32 %v2091, %v2092
    %v2094 = vrot.slane %v2093, 1
    %v2095 = vadd.f32 %v2093, %v2094
    %v2096 = vsel %vm315, %v2018, 0.0
    %v2097 = vsel %vm315, %v2019, 0.0
    %v2098 = vadd.f32 %v2096, %v2097
    %v2099 = vrot.slane %v2098, 4
    %v2100 = vadd.f32 %v2098, %v2099
    %v2101 = vrot.slane %v2100, 2
    %v2102 = vadd.f32 %v2100, %v2101
    %v2103 = vrot.slane %v2102, 1
    %v2104 = vadd.f32 %v2102, %v2103
    %v2105 = vsel %vm315, %v2020, 0.0
    %v2106 = vsel %vm315, %v2021, 0.0
    %v2107 = vadd.f32 %v2105, %v2106
    %v2108 = vrot.slane %v2107, 4
    %v2109 = vadd.f32 %v2107, %v2108
    %v2110 = vrot.slane %v2109, 2
    %v2111 = vadd.f32 %v2109, %v2110
    %v2112 = vrot.slane %v2111, 1
    %v2113 = vadd.f32 %v2111, %v2112
    %v2114 = vsel %vm315, %v2022, 0.0
    %v2115 = vsel %vm315, %v2023, 0.0
    %v2116 = vadd.f32 %v2114, %v2115
    %v2117 = vrot.slane %v2116, 4
    %v2118 = vadd.f32 %v2116, %v2117
    %v2119 = vrot.slane %v2118, 2
    %v2120 = vadd.f32 %v2118, %v2119
    %v2121 = vrot.slane %v2120, 1
    %v2122 = vadd.f32 %v2120, %v2121
    %v2123 = vsel %vm315, %v2024, 0.0
    %v2124 = vsel %vm315, %v2025, 0.0
    %v2125 = vadd.f32 %v2123, %v2124
    %v2126 = vrot.slane %v2125, 4
    %v2127 = vadd.f32 %v2125, %v2126
    %v2128 = vrot.slane %v2127, 2
    %v2129 = vadd.f32 %v2127, %v2128
    %v2130 = vrot.slane %v2129, 1
    %v2131 = vadd.f32 %v2129, %v2130
    %v2132 = vsel %vm315, %v2026, 0.0
    %v2133 = vsel %vm315, %v2027, 0.0
    %v2134 = vadd.f32 %v2132, %v2133
    %v2135 = vrot.slane %v2134, 4
    %v2136 = vadd.f32 %v2134, %v2135
    %v2137 = vrot.slane %v2136, 2
    %v2138 = vadd.f32 %v2136, %v2137
    %v2139 = vrot.slane %v2138, 1
    %v2140 = vadd.f32 %v2138, %v2139
    %v2141 = vsel %vm315, %v2028, 0.0
    %v2142 = vsel %vm315, %v2029, 0.0
    %v2143 = vadd.f32 %v2141, %v2142
    %v2144 = vrot.slane %v2143, 4
    %v2145 = vadd.f32 %v2143, %v2144
    %v2146 = vrot.slane %v2145, 2
    %v2147 = vadd.f32 %v2145, %v2146
    %v2148 = vrot.slane %v2147, 1
    %v2149 = vadd.f32 %v2147, %v2148
    %v2150 = vsel %vm315, %v2030, 0.0
    %v2151 = vsel %vm315, %v2031, 0.0
    %v2152 = vadd.f32 %v2150, %v2151
    %v2153 = vrot.slane %v2152, 4
    %v2154 = vadd.f32 %v2152, %v2153
    %v2155 = vrot.slane %v2154, 2
    %v2156 = vadd.f32 %v2154, %v2155
    %v2157 = vrot.slane %v2156, 1
    %v2158 = vadd.f32 %v2156, %v2157
    %v2159 = vsel %vm315, %v2032, 0.0
    %v2160 = vsel %vm315, %v2033, 0.0
    %v2161 = vadd.f32 %v2159, %v2160
    %v2162 = vrot.slane %v2161, 4
    %v2163 = vadd.f32 %v2161, %v2162
    %v2164 = vrot.slane %v2163, 2
    %v2165 = vadd.f32 %v2163, %v2164
    %v2166 = vrot.slane %v2165, 1
    %v2167 = vadd.f32 %v2165, %v2166
    %v2168 = vsel %vm315, %v2034, 0.0
    %v2169 = vsel %vm315, %v2035, 0.0
    %v2170 = vadd.f32 %v2168, %v2169
    %v2171 = vrot.slane %v2170, 4
    %v2172 = vadd.f32 %v2170, %v2171
    %v2173 = vrot.slane %v2172, 2
    %v2174 = vadd.f32 %v2172, %v2173
    %v2175 = vrot.slane %v2174, 1
    %v2176 = vadd.f32 %v2174, %v2175
    %v2177 = vsel %vm315, %v2036, 0.0
    %v2178 = vsel %vm315, %v2037, 0.0
    %v2179 = vadd.f32 %v2177, %v2178
    %v2180 = vrot.slane %v2179, 4
    %v2181 = vadd.f32 %v2179, %v2180
    %v2182 = vrot.slane %v2181, 2
    %v2183 = vadd.f32 %v2181, %v2182
    %v2184 = vrot.slane %v2183, 1
    %v2185 = vadd.f32 %v2183, %v2184
    %v2186 = vsel %vm315, %v2038, 0.0
    %v2187 = vsel %vm315, %v2039, 0.0
    %v2188 = vadd.f32 %v2186, %v2187
    %v2189 = vrot.slane %v2188, 4
    %v2190 = vadd.f32 %v2188, %v2189
    %v2191 = vrot.slane %v2190, 2
    %v2192 = vadd.f32 %v2190, %v2191
    %v2193 = vrot.slane %v2192, 1
    %v2194 = vadd.f32 %v2192, %v2193
    %v2195 = vsel %vm315, %v2040, 0.0
    %v2196 = vsel %vm315, %v2041, 0.0
    %v2197 = vadd.f32 %v2195, %v2196
    %v2198 = vrot.slane %v2197, 4
    %v2199 = vadd.f32 %v2197, %v2198
    %v2200 = vrot.slane %v2199, 2
    %v2201 = vadd.f32 %v2199, %v2200
    %v2202 = vrot.slane %v2201, 1
    %v2203 = vadd.f32 %v2201, %v2202
    %v2204 = vsel %vm315, %v2042, 0.0
    %v2205 = vsel %vm315, %v2043, 0.0
    %v2206 = vadd.f32 %v2204, %v2205
    %v2207 = vrot.slane %v2206, 4
    %v2208 = vadd.f32 %v2206, %v2207
    %v2209 = vrot.slane %v2208, 2
    %v2210 = vadd.f32 %v2208, %v2209
    %v2211 = vrot.slane %v2210, 1
    %v2212 = vadd.f32 %v2210, %v2211
    %v2213 = vsel %vm315, %v2044, 0.0
    %v2214 = vsel %vm315, %v2045, 0.0
    %v2215 = vadd.f32 %v2213, %v2214
    %v2216 = vrot.slane %v2215, 4
    %v2217 = vadd.f32 %v2215, %v2216
    %v2218 = vrot.slane %v2217, 2
    %v2219 = vadd.f32 %v2217, %v2218
    %v2220 = vrot.slane %v2219, 1
    %v2221 = vadd.f32 %v2219, %v2220
    %v2222 = vsel %vm315, %v2046, 0.0
    %v2223 = vsel %vm315, %v2047, 0.0
    %v2224 = vadd.f32 %v2222, %v2223
    %v2225 = vrot.slane %v2224, 4
    %v2226 = vadd.f32 %v2224, %v2225
    %v2227 = vrot.slane %v2226, 2
    %v2228 = vadd.f32 %v2226, %v2227
    %v2229 = vrot.slane %v2228, 1
    %v2230 = vadd.f32 %v2228, %v2229
    %v2231 = vsel %vm315, %v2048, 0.0
    %v2232 = vsel %vm315, %v2049, 0.0
    %v2233 = vadd.f32 %v2231, %v2232
    %v2234 = vrot.slane %v2233, 4
    %v2235 = vadd.f32 %v2233, %v2234
    %v2236 = vrot.slane %v2235, 2
    %v2237 = vadd.f32 %v2235, %v2236
    %v2238 = vrot.slane %v2237, 1
    %v2239 = vadd.f32 %v2237, %v2238
    %v2240 = vsel %vm315, %v2050, 0.0
    %v2241 = vsel %vm315, %v2051, 0.0
    %v2242 = vadd.f32 %v2240, %v2241
    %v2243 = vrot.slane %v2242, 4
    %v2244 = vadd.f32 %v2242, %v2243
    %v2245 = vrot.slane %v2244, 2
    %v2246 = vadd.f32 %v2244, %v2245
    %v2247 = vrot.slane %v2246, 1
    %v2248 = vadd.f32 %v2246, %v2247
    %v2249 = vsel %vm315, %v2052, 0.0
    %v2250 = vsel %vm315, %v2053, 0.0
    %v2251 = vadd.f32 %v2249, %v2250
    %v2252 = vrot.slane %v2251, 4
    %v2253 = vadd.f32 %v2251, %v2252
    %v2254 = vrot.slane %v2253, 2
    %v2255 = vadd.f32 %v2253, %v2254
    %v2256 = vrot.slane %v2255, 1
    %v2257 = vadd.f32 %v2255, %v2256
    %v2258 = vsel %vm315, %v2054, 0.0
    %v2259 = vsel %vm315, %v2055, 0.0
    %v2260 = vadd.f32 %v2258, %v2259
    %v2261 = vrot.slane %v2260, 4
    %v2262 = vadd.f32 %v2260, %v2261
    %v2263 = vrot.slane %v2262, 2
    %v2264 = vadd.f32 %v2262, %v2263
    %v2265 = vrot.slane %v2264, 1
    %v2266 = vadd.f32 %v2264, %v2265
    %v2267 = vsel %vm315, %v2056, 0.0
    %v2268 = vsel %vm315, %v2057, 0.0
    %v2269 = vadd.f32 %v2267, %v2268
    %v2270 = vrot.slane %v2269, 4
    %v2271 = vadd.f32 %v2269, %v2270
    %v2272 = vrot.slane %v2271, 2
    %v2273 = vadd.f32 %v2271, %v2272
    %v2274 = vrot.slane %v2273, 1
    %v2275 = vadd.f32 %v2273, %v2274
    %v2276 = vsel %vm315, %v2058, 0.0
    %v2277 = vsel %vm315, %v2059, 0.0
    %v2278 = vadd.f32 %v2276, %v2277
    %v2279 = vrot.slane %v2278, 4
    %v2280 = vadd.f32 %v2278, %v2279
    %v2281 = vrot.slane %v2280, 2
    %v2282 = vadd.f32 %v2280, %v2281
    %v2283 = vrot.slane %v2282, 1
    %v2284 = vadd.f32 %v2282, %v2283
    %v2285 = vsel %vm315, %v2060, 0.0
    %v2286 = vsel %vm315, %v2061, 0.0
    %v2287 = vadd.f32 %v2285, %v2286
    %v2288 = vrot.slane %v2287, 4
    %v2289 = vadd.f32 %v2287, %v2288
    %v2290 = vrot.slane %v2289, 2
    %v2291 = vadd.f32 %v2289, %v2290
    %v2292 = vrot.slane %v2291, 1
    %v2293 = vadd.f32 %v2291, %v2292
    %v2294 = vsel %vm315, %v2062, 0.0
    %v2295 = vsel %vm315, %v2063, 0.0
    %v2296 = vadd.f32 %v2294, %v2295
    %v2297 = vrot.slane %v2296, 4
    %v2298 = vadd.f32 %v2296, %v2297
    %v2299 = vrot.slane %v2298, 2
    %v2300 = vadd.f32 %v2298, %v2299
    %v2301 = vrot.slane %v2300, 1
    %v2302 = vadd.f32 %v2300, %v2301
    %v2303 = vsel %vm315, %v2064, 0.0
    %v2304 = vsel %vm315, %v2065, 0.0
    %v2305 = vadd.f32 %v2303, %v2304
    %v2306 = vrot.slane %v2305, 4
    %v2307 = vadd.f32 %v2305, %v2306
    %v2308 = vrot.slane %v2307, 2
    %v2309 = vadd.f32 %v2307, %v2308
    %v2310 = vrot.slane %v2309, 1
    %v2311 = vadd.f32 %v2309, %v2310
    %v2312 = vsel %vm315, %v2066, 0.0
    %v2313 = vsel %vm315, %v2067, 0.0
    %v2314 = vadd.f32 %v2312, %v2313
    %v2315 = vrot.slane %v2314, 4
    %v2316 = vadd.f32 %v2314, %v2315
    %v2317 = vrot.slane %v2316, 2
    %v2318 = vadd.f32 %v2316, %v2317
    %v2319 = vrot.slane %v2318, 1
    %v2320 = vadd.f32 %v2318, %v2319
    %v2321 = vsel %vm315, %v2068, 0.0
    %v2322 = vsel %vm315, %v2069, 0.0
    %v2323 = vadd.f32 %v2321, %v2322
    %v2324 = vrot.slane %v2323, 4
    %v2325 = vadd.f32 %v2323, %v2324
    %v2326 = vrot.slane %v2325, 2
    %v2327 = vadd.f32 %v2325, %v2326
    %v2328 = vrot.slane %v2327, 1
    %v2329 = vadd.f32 %v2327, %v2328
    %v2330 = vsel %vm315, %v2070, 0.0
    %v2331 = vsel %vm315, %v2071, 0.0
    %v2332 = vadd.f32 %v2330, %v2331
    %v2333 = vrot.slane %v2332, 4
    %v2334 = vadd.f32 %v2332, %v2333
    %v2335 = vrot.slane %v2334, 2
    %v2336 = vadd.f32 %v2334, %v2335
    %v2337 = vrot.slane %v2336, 1
    %v2338 = vadd.f32 %v2336, %v2337
    %v2339 = vsel %vm315, %v2072, 0.0
    %v2340 = vsel %vm315, %v2073, 0.0
    %v2341 = vadd.f32 %v2339, %v2340
    %v2342 = vrot.slane %v2341, 4
    %v2343 = vadd.f32 %v2341, %v2342
    %v2344 = vrot.slane %v2343, 2
    %v2345 = vadd.f32 %v2343, %v2344
    %v2346 = vrot.slane %v2345, 1
    %v2347 = vadd.f32 %v2345, %v2346
    %v2348 = vsel %vm315, %v2074, 0.0
    %v2349 = vsel %vm315, %v2075, 0.0
    %v2350 = vadd.f32 %v2348, %v2349
    %v2351 = vrot.slane %v2350, 4
    %v2352 = vadd.f32 %v2350, %v2351
    %v2353 = vrot.slane %v2352, 2
    %v2354 = vadd.f32 %v2352, %v2353
    %v2355 = vrot.slane %v2354, 1
    %v2356 = vadd.f32 %v2354, %v2355
    %v2357 = vsel %vm315, %v2076, 0.0
    %v2358 = vsel %vm315, %v2077, 0.0
    %v2359 = vadd.f32 %v2357, %v2358
    %v2360 = vrot.slane %v2359, 4
    %v2361 = vadd.f32 %v2359, %v2360
    %v2362 = vrot.slane %v2361, 2
    %v2363 = vadd.f32 %v2361, %v2362
    %v2364 = vrot.slane %v2363, 1
    %v2365 = vadd.f32 %v2363, %v2364
    %v2398 = vsel %vm1502, %v2095, %v2086
    %v2399 = vsel %vm1504, %v2104, %v2398
    %v2400 = vsel %vm1506, %v2113, %v2399
    %v2401 = vsel %vm1508, %v2122, %v2400
    %v2402 = vsel %vm1510, %v2131, %v2401
    %v2403 = vsel %vm1512, %v2140, %v2402
    %v2404 = vsel %vm1514, %v2149, %v2403
    %v2405 = vsel %vm1502, %v2167, %v2158
    %v2406 = vsel %vm1504, %v2176, %v2405
    %v2407 = vsel %vm1506, %v2185, %v2406
    %v2408 = vsel %vm1508, %v2194, %v2407
    %v2409 = vsel %vm1510, %v2203, %v2408
    %v2410 = vsel %vm1512, %v2212, %v2409
    %v2411 = vsel %vm1514, %v2221, %v2410
    %v2412 = vsel %vm1502, %v2239, %v2230
    %v2413 = vsel %vm1504, %v2248, %v2412
    %v2414 = vsel %vm1506, %v2257, %v2413
    %v2415 = vsel %vm1508, %v2266, %v2414
    %v2416 = vsel %vm1510, %v2275, %v2415
    %v2417 = vsel %vm1512, %v2284, %v2416
    %v2418 = vsel %vm1514, %v2293, %v2417
    %v2419 = vsel %vm1502, %v2311, %v2302
    %v2420 = vsel %vm1504, %v2320, %v2419
    %v2421 = vsel %vm1506, %v2329, %v2420
    %v2422 = vsel %vm1508, %v2338, %v2421
    %v2423 = vsel %vm1510, %v2347, %v2422
    %v2424 = vsel %vm1512, %v2356, %v2423
    %v2425 = vsel %vm1514, %v2365, %v2424
    %2430 = vst.msk [vmem:[#allocation10] sm:$0xff] %vm315, %v2404
    %2431 = vst.msk [vmem:[#allocation10 + $0x8] sm:$0xff] %vm315, %v2411
    %2432 = vst.msk [vmem:[#allocation10 + $0x10] sm:$0xff] %vm315, %v2418
    %2433 = vst.msk [vmem:[#allocation10 + $0x18] sm:$0xff] %vm315, %v2425
    // Predicated region
    $region38: #{tpu_custom_call.1} parent=1 // pred_check
      _
    $region39: #{tpu_custom_call.1} parent=1 // pred_check_branch
      %2435 = sbr.rel (0) target = $region41
    $region40: #{tpu_custom_call.1} parent=1 // pred_region
      %s2437 = ssub.s32 512, 512
      %2438 = vsyncadd [#allocation4], %s2437
      %s2439 = sshll.u32 [#allocation10], 4
      %s2440 = int_to_ptr.vmem [resolvable:$true] %s2439
      %2445 = dma.vmem_to_hbm [thread:$0]  %s2440, 512, %s5, [#allocation4], 128, 128, 8
    $region41: #{tpu_custom_call.1} parent=1 // pred_fallthru
      _
    // Predicated region
    $region42: #{tpu_custom_call.1} parent=1 // pred_check
      _
    $region43: #{tpu_custom_call.1} parent=1 // pred_check_branch
      %2447 = sbr.rel (0) target = $region45
    $region44: #{tpu_custom_call.1} parent=1 // pred_region
      %2448 = dma.done [#allocation4], 512
    $region45: #{tpu_custom_call.1} parent=1 // pred_fallthru
      _
    %2449 = vsyncpa [#allocation3], 1
    %2450 = vsyncpa [#allocation6], 1
    %2451 = vsyncpa [#allocation9], 1
    %2452 = vsyncpa [#allocation4], 1

</llo_original>
